<compile_context>
chip_gen: v6e
topology: v6e:2x2x1
jax: 0.10.0
libtpu: 0.0.40
codegen_flags: <defaults>
</compile_context>

<pallas_src>
import numpy as np
import jax
import jax.numpy as jnp
from jax import lax
from jax.experimental import pallas as pl
from jax.experimental.pallas import tpu as pltpu


B_TILE_MAX = 128   # max samples per grid step -> up to T*128 = 1792 MXU rows


def _round_up(n, m):
    return -(-n // m) * m


# ---------------------------------------------------------------------------
# Kernel
# ---------------------------------------------------------------------------
def _temporal_block(h, s, ws1, b1, ws2, b2, wd, bd):
    """One TemporalBlock on a time-major (M, C_in) fp32 activation slab.

    s:   causal shift in rows (= dilation * bt, a multiple of 8).
    ws1: stacked conv1 weight [W_tap0; W_tap1], (2*C_in, C_out) bf16.
    ws2: stacked conv2 weight, (2*C_out, C_out) bf16.
    wd:  1x1 residual conv weight, (C_in, C_out) bf16.
    """
    M, cin = h.shape
    cout = b1.shape[-1]
    bf16 = jnp.bfloat16
    hb = h.astype(bf16)

    # conv1: out[t] = x[t-d] @ W0 + x[t] @ W1 + b  (zero padding for t < d).
    # Time-major rows -> the shifted tap is [zeros(d*bt); h[:-d*bt]].
    sh = jnp.concatenate([jnp.zeros((s, cin), bf16), hb[:M - s, :]], axis=0)
    hcat = jnp.concatenate([sh, hb], axis=-1)                      # (M, 2*cin)
    c1 = jnp.dot(hcat, ws1[...], preferred_element_type=jnp.float32) + b1[...]
    h1 = jnp.maximum(c1, 0.0)
    # TODO(synk): Dropout(p=0.2) omitted (eval-mode identity).

    h1b = h1.astype(bf16)
    sh1 = jnp.concatenate([jnp.zeros((s, cout), bf16), h1b[:M - s, :]], axis=0)
    hcat2 = jnp.concatenate([sh1, h1b], axis=-1)                   # (M, 2*cout)
    c2 = jnp.dot(hcat2, ws2[...], preferred_element_type=jnp.float32) + b2[...]
    h2 = jnp.maximum(c2, 0.0)
    # TODO(synk): second Dropout(p=0.2) omitted (eval-mode identity).

    # sub_branch (1x1 conv) computed last to keep live ranges short.
    res = jnp.dot(hb, wd[...], preferred_element_type=jnp.float32) + bd[...]
    return jnp.maximum(h2 + res, 0.0)


def tcn_kernel(x_ref,
               w1s, b1, w2s, b2, wd1, bd1,
               w3s, b3, w4s, b4, wd2, bd2,
               wc1, bc1, wc2, bc2, wc3, bc3,
               out_ref):
    bt = out_ref.shape[0]                                  # samples per tile
    M = x_ref.shape[0]                                     # = T * bt
    T = M // bt
    h = x_ref[...].astype(jnp.float32)                     # (T*bt, C_in)

    # TemporalBlock 1: in=5 -> out=16, dilation=1
    h = _temporal_block(h, bt, w1s, b1, w2s, b2, wd1, bd1)
    # TemporalBlock 2: in=16 -> out=32, dilation=2
    h = _temporal_block(h, 2 * bt, w3s, b3, w4s, b4, wd2, bd2)

    # AdaptiveAvgPool1d(7): equal windows of w = T // 7 contiguous timesteps;
    # each window is a sum of w contiguous (bt, C) row slabs (1/w folded into
    # wc1).  Lane-concat the 7 windows -> (bt, 7*C) classifier input.
    n_pool = 7
    w = T // n_pool
    parts = []
    for l in range(n_pool):
        acc = h[(l * w) * bt:(l * w + 1) * bt, :]
        for j in range(1, w):
            acc = acc + h[(l * w + j) * bt:(l * w + j + 1) * bt, :]
        parts.append(acc)
    poolcat = jnp.concatenate(parts, axis=-1).astype(jnp.bfloat16)   # (bt, 7*C)

    # Classifier: Linear(7*C -> 128) + ReLU, Linear(128 -> 64) + ReLU,
    # Linear(64 -> n_classes) padded to 128 output lanes (unmasked store).
    z = jnp.maximum(jnp.dot(poolcat, wc1[...],
                            preferred_element_type=jnp.float32) + bc1[...], 0.0)
    # TODO(synk): Dropout(p=0.5) omitted (eval-mode identity).
    z = jnp.maximum(jnp.dot(z.astype(jnp.bfloat16), wc2[...],
                            preferred_element_type=jnp.float32) + bc2[...], 0.0)
    # TODO(synk): Dropout(p=0.5) omitted (eval-mode identity).
    logits = jnp.dot(z.astype(jnp.bfloat16), wc3[...],
                     preferred_element_type=jnp.float32) + bc3[...]
    out_ref[...] = logits.astype(out_ref.dtype)            # (bt, 128)


# ---------------------------------------------------------------------------
# Host-side helpers
# ---------------------------------------------------------------------------
def adaptive_pool_matrix(T, L=7):
    """AdaptiveAvgPool1d(L) as an (L, T) averaging matrix (reference only)."""
    P = np.zeros((L, T), np.float32)
    for i in range(L):
        s = (i * T) // L
        e = -((-(i + 1) * T) // L)     # ceil((i+1)*T/L)
        P[i, s:e] = 1.0 / (e - s)
    return P


_W_NAMES = ["w1s", "b1", "w2s", "b2", "wd1", "bd1",
            "w3s", "b3", "w4s", "b4", "wd2", "bd2",
            "wc1", "bc1", "wc2", "bc2", "wc3", "bc3"]


def _prepare_kernel_weights(p, T):
    f32, bf16 = jnp.float32, jnp.bfloat16
    k = {}

    def stack2(wconv):
        # PyTorch Conv1d weight (out, in, 2) -> stacked (2*in, out),
        # tap-0 (the dilated/shifted tap) rows first.
        return jnp.concatenate([wconv[:, :, 0].T, wconv[:, :, 1].T],
                               axis=0).astype(bf16)

    # TemporalBlock 1 (dilation 1)
    k["w1s"] = stack2(p["conv1_w"]); k["b1"] = p["conv1_b"][None, :].astype(f32)
    k["w2s"] = stack2(p["conv2_w"]); k["b2"] = p["conv2_b"][None, :].astype(f32)
    k["wd1"] = p["down1_w"][:, :, 0].T.astype(bf16)
    k["bd1"] = p["down1_b"][None, :].astype(f32)

    # TemporalBlock 2 (dilation 2)
    k["w3s"] = stack2(p["conv3_w"]); k["b3"] = p["conv3_b"][None, :].astype(f32)
    k["w4s"] = stack2(p["conv4_w"]); k["b4"] = p["conv4_b"][None, :].astype(f32)
    k["wd2"] = p["down2_w"][:, :, 0].T.astype(bf16)
    k["bd2"] = p["down2_b"][None, :].astype(f32)

    # Classifier.  PyTorch Flatten of (B, C, 7) uses flat index c*7 + l; the
    # kernel's pooled slab is lane-ordered l*C + c, so reorder lin1_w.T rows.
    # The 1/window-size pooling factor is folded in here.
    C = p["conv4_w"].shape[0]
    n_pool = 7
    win = T // n_pool
    w1t = p["lin1_w"].T                                    # (7*C, 128), rows c*7+l
    wc1 = w1t.reshape(C, n_pool, 128).transpose(1, 0, 2).reshape(n_pool * C, 128)
    k["wc1"] = (wc1 / float(win)).astype(bf16)
    k["bc1"] = p["lin1_b"][None, :].astype(f32)
    k["wc2"] = p["lin2_w"].T.astype(bf16)
    k["bc2"] = p["lin2_b"][None, :].astype(f32)

    # Final Linear padded to 128 output lanes (unmasked vst in the kernel).
    n_classes = p["lin3_w"].shape[0]
    wc3 = jnp.zeros((p["lin3_w"].shape[1], 128), f32).at[:, :n_classes].set(
        p["lin3_w"].T)
    bc3 = jnp.zeros((1, 128), f32).at[0, :n_classes].set(p["lin3_b"])
    k["wc3"] = wc3.astype(bf16)
    k["bc3"] = bc3
    return [k[n] for n in _W_NAMES]


def _const_spec(shape):
    zeros = (0,) * len(shape)
    return pl.BlockSpec(shape, lambda i, _z=zeros: _z)


# ---------------------------------------------------------------------------
# Wrapper
# ---------------------------------------------------------------------------
@jax.jit
def tcn_forward(x, params):
    B, T, C_in = x.shape
    n_classes = params["lin3_w"].shape[0]
    # TODO(synk): only equal-sized adaptive-pool windows (T % 7 == 0) supported.
    assert T % 7 == 0, "kernel assumes equal AdaptiveAvgPool1d(7) windows"
    assert n_classes <= 128

    # Batch tile: multiple of 8 (aligned sublane slices / shifts); prefer at
    # least 2 grid steps when B allows it so v7x can use both TensorCores.
    if B > 8:
        bt = min(B_TILE_MAX, _round_up(-(-B // 2), 8))
    else:
        bt = _round_up(B, 8)
    n_blk = -(-B // bt)
    B_pad = n_blk * bt

    weights = _prepare_kernel_weights(params, T)

    # Time-major flatten within each batch tile: rows ordered (tile, t, b_local)
    # so causal shifts and pool windows are contiguous, 8-aligned row ranges.
    x_pad = jnp.pad(x, ((0, B_pad - B), (0, 0), (0, 0)))
    x_tm = (x_pad.reshape(n_blk, bt, T, C_in)
                 .transpose(0, 2, 1, 3)
                 .reshape(n_blk * T * bt, C_in))

    in_specs = [pl.BlockSpec((T * bt, C_in), lambda i: (i, 0))]
    in_specs += [_const_spec(w.shape) for w in weights]

    out = pl.pallas_call(
        tcn_kernel,
        out_shape=jax.ShapeDtypeStruct((B_pad, 128), jnp.float32),
        grid_spec=pltpu.PrefetchScalarGridSpec(
            num_scalar_prefetch=0,
            grid=(n_blk,),
            in_specs=in_specs,
            out_specs=pl.BlockSpec((bt, 128), lambda i: (i, 0)),
        ),
        compiler_params=pltpu.CompilerParams(
            dimension_semantics=("parallel",)),
    )(x_tm, *weights)
    return out[:B, :n_classes]


# ---------------------------------------------------------------------------
# Deterministic parameter init (synthetic; mirrors the module's shapes)
# ---------------------------------------------------------------------------
def init_params(key, input_dim=5, num_channels=(16, 32), kernel_size=2, n_classes=8):
    chans = [input_dim] + list(num_channels)
    keys = iter(jax.random.split(key, 32))
    p = {}

    def conv_w(cout, cin, k):
        # PyTorch Conv1d weight layout (out, in, k), init normal(0, 0.01)
        return jax.random.normal(next(keys), (cout, cin, k), jnp.float32) * 0.01

    def vec(n, scale=0.01):
        return jax.random.normal(next(keys), (n,), jnp.float32) * scale

    p["conv1_w"] = conv_w(chans[1], chans[0], kernel_size); p["conv1_b"] = vec(chans[1])
    p["conv2_w"] = conv_w(chans[1], chans[1], kernel_size); p["conv2_b"] = vec(chans[1])
    p["down1_w"] = conv_w(chans[1], chans[0], 1);           p["down1_b"] = vec(chans[1])

    p["conv3_w"] = conv_w(chans[2], chans[1], kernel_size); p["conv3_b"] = vec(chans[2])
    p["conv4_w"] = conv_w(chans[2], chans[2], kernel_size); p["conv4_b"] = vec(chans[2])
    p["down2_w"] = conv_w(chans[2], chans[1], 1);           p["down2_b"] = vec(chans[2])

    C = chans[-1]
    p["lin1_w"] = jax.random.normal(next(keys), (128, 7 * C), jnp.float32) * 0.05
    p["lin1_b"] = vec(128, 0.05)
    p["lin2_w"] = jax.random.normal(next(keys), (64, 128), jnp.float32) * 0.05
    p["lin2_b"] = vec(64, 0.05)
    p["lin3_w"] = jax.random.normal(next(keys), (n_classes, 64), jnp.float32) * 0.05
    p["lin3_b"] = vec(n_classes, 0.05)
    return p


# ---------------------------------------------------------------------------
# Pure-JAX (XLA) reference mirroring the PyTorch module exactly (fp32, NCW convs)
# ---------------------------------------------------------------------------
def torch_reference(x, p):
    xc = jnp.transpose(x, (0, 2, 1))   # channel_last=True -> (B, C, T)
    T = x.shape[1]

    def conv1d(h, w, b, dilation, padding):
        out = lax.conv_general_dilated(
            h, w, window_strides=(1,), padding=[(padding, padding)],
            rhs_dilation=(dilation,), dimension_numbers=("NCH", "OIH", "NCH"))
        return out + b[None, :, None]

    def block(h, w1, bb1, w2, bb2, wd, bd, d):
        pad = (w1.shape[-1] - 1) * d
        L = h.shape[-1]
        o = jnp.maximum(conv1d(h, w1, bb1, d, pad)[:, :, :L], 0.0)
        o = jnp.maximum(conv1d(o, w2, bb2, d, pad)[:, :, :L], 0.0)
        res = conv1d(h, wd, bd, 1, 0)
        return jnp.maximum(o + res, 0.0)

    h = block(xc, p["conv1_w"], p["conv1_b"], p["conv2_w"], p["conv2_b"],
              p["down1_w"], p["down1_b"], 1)
    h = block(h, p["conv3_w"], p["conv3_b"], p["conv4_w"], p["conv4_b"],
              p["down2_w"], p["down2_b"], 2)

    pt = jnp.asarray(adaptive_pool_matrix(T, 7))
    pooled = jnp.einsum("bct,ot->bco", h, pt)              # AdaptiveAvgPool1d(7)
    flat = pooled.reshape(pooled.shape[0], -1)             # Flatten (c*7 + l)
    z = jnp.maximum(flat @ p["lin1_w"].T + p["lin1_b"], 0.0)
    z = jnp.maximum(z @ p["lin2_w"].T + p["lin2_b"], 0.0)
    return z @ p["lin3_w"].T + p["lin3_b"]


# ---------------------------------------------------------------------------
if __name__ == "__main__":
    B, T, C_IN, N_CLASSES = 2, 14, 5, 8

    key = jax.random.PRNGKey(0)
    k_x, k_p = jax.random.split(key)
    x = jax.random.normal(k_x, (B, T, C_IN), jnp.float32)
    params = init_params(k_p, input_dim=C_IN, num_channels=(16, 32),
                         kernel_size=2, n_classes=N_CLASSES)

    out = jax.block_until_ready(tcn_forward(x, params))
    ref = jax.block_until_ready(torch_reference(x, params))

    assert out.shape == (B, N_CLASSES), out.shape
    # bf16 MXU operands (fp32 accumulation) -> loosened tolerance vs fp32 reference.
    np.testing.assert_allclose(np.asarray(out), np.asarray(ref), atol=2e-2, rtol=2e-2)

    print("KERNEL_OK")
</pallas_src>

<mosaic_0001>
module attributes {stable_mosaic.version = 11 : i64} {
  func.func @tcn_kernel(%arg0: i32, %arg1: memref<112x5xf32, #tpu.memory_space<vmem>>, %arg2: memref<10x16xbf16, #tpu.memory_space<vmem>>, %arg3: memref<1x16xf32, #tpu.memory_space<vmem>>, %arg4: memref<32x16xbf16, #tpu.memory_space<vmem>>, %arg5: memref<1x16xf32, #tpu.memory_space<vmem>>, %arg6: memref<5x16xbf16, #tpu.memory_space<vmem>>, %arg7: memref<1x16xf32, #tpu.memory_space<vmem>>, %arg8: memref<32x32xbf16, #tpu.memory_space<vmem>>, %arg9: memref<1x32xf32, #tpu.memory_space<vmem>>, %arg10: memref<64x32xbf16, #tpu.memory_space<vmem>>, %arg11: memref<1x32xf32, #tpu.memory_space<vmem>>, %arg12: memref<16x32xbf16, #tpu.memory_space<vmem>>, %arg13: memref<1x32xf32, #tpu.memory_space<vmem>>, %arg14: memref<224x128xbf16, #tpu.memory_space<vmem>>, %arg15: memref<1x128xf32, #tpu.memory_space<vmem>>, %arg16: memref<128x64xbf16, #tpu.memory_space<vmem>>, %arg17: memref<1x64xf32, #tpu.memory_space<vmem>>, %arg18: memref<64x128xbf16, #tpu.memory_space<vmem>>, %arg19: memref<1x128xf32, #tpu.memory_space<vmem>>, %arg20: memref<8x128xf32, #tpu.memory_space<vmem>>) attributes {dimension_semantics = [#tpu.dimension_semantics<parallel>], iteration_bounds = array<i64: 1>, scalar_prefetch = 0 : i64, scratch_operands = 0 : i64, tpu.core_type = #tpu.core_type<tc>, window_params = [{transform_indices = @transform_0, window_bounds = array<i64: 112, 5>}, {pipeline_mode = #tpu.pipeline_mode<synchronous>, transform_indices = @transform_1, window_bounds = array<i64: 10, 16>}, {pipeline_mode = #tpu.pipeline_mode<synchronous>, transform_indices = @transform_2, window_bounds = array<i64: 1, 16>}, {pipeline_mode = #tpu.pipeline_mode<synchronous>, transform_indices = @transform_3, window_bounds = array<i64: 32, 16>}, {pipeline_mode = #tpu.pipeline_mode<synchronous>, transform_indices = @transform_4, window_bounds = array<i64: 1, 16>}, {pipeline_mode = #tpu.pipeline_mode<synchronous>, transform_indices = @transform_5, window_bounds = array<i64: 5, 16>}, {pipeline_mode = #tpu.pipeline_mode<synchronous>, transform_indices = @transform_6, window_bounds = array<i64: 1, 16>}, {pipeline_mode = #tpu.pipeline_mode<synchronous>, transform_indices = @transform_7, window_bounds = array<i64: 32, 32>}, {pipeline_mode = #tpu.pipeline_mode<synchronous>, transform_indices = @transform_8, window_bounds = array<i64: 1, 32>}, {pipeline_mode = #tpu.pipeline_mode<synchronous>, transform_indices = @transform_9, window_bounds = array<i64: 64, 32>}, {pipeline_mode = #tpu.pipeline_mode<synchronous>, transform_indices = @transform_10, window_bounds = array<i64: 1, 32>}, {pipeline_mode = #tpu.pipeline_mode<synchronous>, transform_indices = @transform_11, window_bounds = array<i64: 16, 32>}, {pipeline_mode = #tpu.pipeline_mode<synchronous>, transform_indices = @transform_12, window_bounds = array<i64: 1, 32>}, {pipeline_mode = #tpu.pipeline_mode<synchronous>, transform_indices = @transform_13, window_bounds = array<i64: 224, 128>}, {pipeline_mode = #tpu.pipeline_mode<synchronous>, transform_indices = @transform_14, window_bounds = array<i64: 1, 128>}, {pipeline_mode = #tpu.pipeline_mode<synchronous>, transform_indices = @transform_15, window_bounds = array<i64: 128, 64>}, {pipeline_mode = #tpu.pipeline_mode<synchronous>, transform_indices = @transform_16, window_bounds = array<i64: 1, 64>}, {pipeline_mode = #tpu.pipeline_mode<synchronous>, transform_indices = @transform_17, window_bounds = array<i64: 64, 128>}, {pipeline_mode = #tpu.pipeline_mode<synchronous>, transform_indices = @transform_18, window_bounds = array<i64: 1, 128>}, {transform_indices = @transform_19, window_bounds = array<i64: 8, 128>}]} {
    %c0 = arith.constant 0 : index
    %c0_0 = arith.constant 0 : index
    %0 = vector.load %arg1[%c0, %c0_0] : memref<112x5xf32, #tpu.memory_space<vmem>>, vector<112x5xf32>
    %1 = arith.truncf %0 : vector<112x5xf32> to vector<112x5xbf16>
    %cst = arith.constant 0.000000e+00 : bf16
    %2 = vector.broadcast %cst : bf16 to vector<8x5xbf16>
    %3 = vector.extract_strided_slice %1 {offsets = [0, 0], sizes = [104, 5], strides = [1, 1]} : vector<112x5xbf16> to vector<104x5xbf16>
    %4 = tpu.concatenate %2, %3 in 0 : vector<8x5xbf16>, vector<104x5xbf16> -> vector<112x5xbf16>
    %5 = tpu.concatenate %4, %1 in 1 : vector<112x5xbf16>, vector<112x5xbf16> -> vector<112x10xbf16>
    %c0_1 = arith.constant 0 : index
    %c0_2 = arith.constant 0 : index
    %6 = vector.load %arg2[%c0_1, %c0_2] : memref<10x16xbf16, #tpu.memory_space<vmem>>, vector<10x16xbf16>
    %cst_3 = arith.constant dense<0.000000e+00> : vector<112x16xf32>
    %7 = tpu.matmul %5, %6, %cst_3 {dimension_numbers = #tpu.dot_dimension_numbers<[1], [0], [0], [1], [0, 0, 1, 1], [], []>} : vector<112x10xbf16>, vector<10x16xbf16>, vector<112x16xf32> -> vector<112x16xf32>
    %c0_4 = arith.constant 0 : index
    %c0_5 = arith.constant 0 : index
    %8 = vector.load %arg3[%c0_4, %c0_5] : memref<1x16xf32, #tpu.memory_space<vmem>>, vector<1x16xf32>
    %9 = vector.broadcast %8 : vector<1x16xf32> to vector<112x16xf32>
    %10 = arith.addf %7, %9 : vector<112x16xf32>
    %cst_6 = arith.constant 0.000000e+00 : f32
    %11 = vector.broadcast %cst_6 : f32 to vector<112x16xf32>
    %12 = arith.maximumf %10, %11 : vector<112x16xf32>
    %13 = arith.truncf %12 : vector<112x16xf32> to vector<112x16xbf16>
    %cst_7 = arith.constant 0.000000e+00 : bf16
    %14 = vector.broadcast %cst_7 : bf16 to vector<8x16xbf16>
    %15 = vector.extract_strided_slice %13 {offsets = [0, 0], sizes = [104, 16], strides = [1, 1]} : vector<112x16xbf16> to vector<104x16xbf16>
    %16 = tpu.concatenate %14, %15 in 0 : vector<8x16xbf16>, vector<104x16xbf16> -> vector<112x16xbf16>
    %17 = tpu.concatenate %16, %13 in 1 : vector<112x16xbf16>, vector<112x16xbf16> -> vector<112x32xbf16>
    %c0_8 = arith.constant 0 : index
    %c0_9 = arith.constant 0 : index
    %18 = vector.load %arg4[%c0_8, %c0_9] : memref<32x16xbf16, #tpu.memory_space<vmem>>, vector<32x16xbf16>
    %cst_10 = arith.constant dense<0.000000e+00> : vector<112x16xf32>
    %19 = tpu.matmul %17, %18, %cst_10 {dimension_numbers = #tpu.dot_dimension_numbers<[1], [0], [0], [1], [0, 0, 1, 1], [], []>} : vector<112x32xbf16>, vector<32x16xbf16>, vector<112x16xf32> -> vector<112x16xf32>
    %c0_11 = arith.constant 0 : index
    %c0_12 = arith.constant 0 : index
    %20 = vector.load %arg5[%c0_11, %c0_12] : memref<1x16xf32, #tpu.memory_space<vmem>>, vector<1x16xf32>
    %21 = vector.broadcast %20 : vector<1x16xf32> to vector<112x16xf32>
    %22 = arith.addf %19, %21 : vector<112x16xf32>
    %cst_13 = arith.constant 0.000000e+00 : f32
    %23 = vector.broadcast %cst_13 : f32 to vector<112x16xf32>
    %24 = arith.maximumf %22, %23 : vector<112x16xf32>
    %c0_14 = arith.constant 0 : index
    %c0_15 = arith.constant 0 : index
    %25 = vector.load %arg6[%c0_14, %c0_15] : memref<5x16xbf16, #tpu.memory_space<vmem>>, vector<5x16xbf16>
    %cst_16 = arith.constant dense<0.000000e+00> : vector<112x16xf32>
    %26 = tpu.matmul %1, %25, %cst_16 {dimension_numbers = #tpu.dot_dimension_numbers<[1], [0], [0], [1], [0, 0, 1, 1], [], []>} : vector<112x5xbf16>, vector<5x16xbf16>, vector<112x16xf32> -> vector<112x16xf32>
    %c0_17 = arith.constant 0 : index
    %c0_18 = arith.constant 0 : index
    %27 = vector.load %arg7[%c0_17, %c0_18] : memref<1x16xf32, #tpu.memory_space<vmem>>, vector<1x16xf32>
    %28 = vector.broadcast %27 : vector<1x16xf32> to vector<112x16xf32>
    %29 = arith.addf %26, %28 : vector<112x16xf32>
    %30 = arith.addf %24, %29 : vector<112x16xf32>
    %cst_19 = arith.constant 0.000000e+00 : f32
    %31 = vector.broadcast %cst_19 : f32 to vector<112x16xf32>
    %32 = arith.maximumf %30, %31 : vector<112x16xf32>
    %33 = arith.truncf %32 : vector<112x16xf32> to vector<112x16xbf16>
    %cst_20 = arith.constant 0.000000e+00 : bf16
    %34 = vector.broadcast %cst_20 : bf16 to vector<16x16xbf16>
    %35 = vector.extract_strided_slice %33 {offsets = [0, 0], sizes = [96, 16], strides = [1, 1]} : vector<112x16xbf16> to vector<96x16xbf16>
    %36 = tpu.concatenate %34, %35 in 0 : vector<16x16xbf16>, vector<96x16xbf16> -> vector<112x16xbf16>
    %37 = tpu.concatenate %36, %33 in 1 : vector<112x16xbf16>, vector<112x16xbf16> -> vector<112x32xbf16>
    %c0_21 = arith.constant 0 : index
    %c0_22 = arith.constant 0 : index
    %38 = vector.load %arg8[%c0_21, %c0_22] : memref<32x32xbf16, #tpu.memory_space<vmem>>, vector<32x32xbf16>
    %cst_23 = arith.constant dense<0.000000e+00> : vector<112x32xf32>
    %39 = tpu.matmul %37, %38, %cst_23 {dimension_numbers = #tpu.dot_dimension_numbers<[1], [0], [0], [1], [0, 0, 1, 1], [], []>} : vector<112x32xbf16>, vector<32x32xbf16>, vector<112x32xf32> -> vector<112x32xf32>
    %c0_24 = arith.constant 0 : index
    %c0_25 = arith.constant 0 : index
    %40 = vector.load %arg9[%c0_24, %c0_25] : memref<1x32xf32, #tpu.memory_space<vmem>>, vector<1x32xf32>
    %41 = vector.broadcast %40 : vector<1x32xf32> to vector<112x32xf32>
    %42 = arith.addf %39, %41 : vector<112x32xf32>
    %cst_26 = arith.constant 0.000000e+00 : f32
    %43 = vector.broadcast %cst_26 : f32 to vector<112x32xf32>
    %44 = arith.maximumf %42, %43 : vector<112x32xf32>
    %45 = arith.truncf %44 : vector<112x32xf32> to vector<112x32xbf16>
    %cst_27 = arith.constant 0.000000e+00 : bf16
    %46 = vector.broadcast %cst_27 : bf16 to vector<16x32xbf16>
    %47 = vector.extract_strided_slice %45 {offsets = [0, 0], sizes = [96, 32], strides = [1, 1]} : vector<112x32xbf16> to vector<96x32xbf16>
    %48 = tpu.concatenate %46, %47 in 0 : vector<16x32xbf16>, vector<96x32xbf16> -> vector<112x32xbf16>
    %49 = tpu.concatenate %48, %45 in 1 : vector<112x32xbf16>, vector<112x32xbf16> -> vector<112x64xbf16>
    %c0_28 = arith.constant 0 : index
    %c0_29 = arith.constant 0 : index
    %50 = vector.load %arg10[%c0_28, %c0_29] : memref<64x32xbf16, #tpu.memory_space<vmem>>, vector<64x32xbf16>
    %cst_30 = arith.constant dense<0.000000e+00> : vector<112x32xf32>
    %51 = tpu.matmul %49, %50, %cst_30 {dimension_numbers = #tpu.dot_dimension_numbers<[1], [0], [0], [1], [0, 0, 1, 1], [], []>} : vector<112x64xbf16>, vector<64x32xbf16>, vector<112x32xf32> -> vector<112x32xf32>
    %c0_31 = arith.constant 0 : index
    %c0_32 = arith.constant 0 : index
    %52 = vector.load %arg11[%c0_31, %c0_32] : memref<1x32xf32, #tpu.memory_space<vmem>>, vector<1x32xf32>
    %53 = vector.broadcast %52 : vector<1x32xf32> to vector<112x32xf32>
    %54 = arith.addf %51, %53 : vector<112x32xf32>
    %cst_33 = arith.constant 0.000000e+00 : f32
    %55 = vector.broadcast %cst_33 : f32 to vector<112x32xf32>
    %56 = arith.maximumf %54, %55 : vector<112x32xf32>
    %c0_34 = arith.constant 0 : index
    %c0_35 = arith.constant 0 : index
    %57 = vector.load %arg12[%c0_34, %c0_35] : memref<16x32xbf16, #tpu.memory_space<vmem>>, vector<16x32xbf16>
    %cst_36 = arith.constant dense<0.000000e+00> : vector<112x32xf32>
    %58 = tpu.matmul %33, %57, %cst_36 {dimension_numbers = #tpu.dot_dimension_numbers<[1], [0], [0], [1], [0, 0, 1, 1], [], []>} : vector<112x16xbf16>, vector<16x32xbf16>, vector<112x32xf32> -> vector<112x32xf32>
    %c0_37 = arith.constant 0 : index
    %c0_38 = arith.constant 0 : index
    %59 = vector.load %arg13[%c0_37, %c0_38] : memref<1x32xf32, #tpu.memory_space<vmem>>, vector<1x32xf32>
    %60 = vector.broadcast %59 : vector<1x32xf32> to vector<112x32xf32>
    %61 = arith.addf %58, %60 : vector<112x32xf32>
    %62 = arith.addf %56, %61 : vector<112x32xf32>
    %cst_39 = arith.constant 0.000000e+00 : f32
    %63 = vector.broadcast %cst_39 : f32 to vector<112x32xf32>
    %64 = arith.maximumf %62, %63 : vector<112x32xf32>
    %65 = vector.extract_strided_slice %64 {offsets = [0, 0], sizes = [8, 32], strides = [1, 1]} : vector<112x32xf32> to vector<8x32xf32>
    %66 = vector.extract_strided_slice %64 {offsets = [8, 0], sizes = [8, 32], strides = [1, 1]} : vector<112x32xf32> to vector<8x32xf32>
    %67 = arith.addf %65, %66 : vector<8x32xf32>
    %68 = vector.extract_strided_slice %64 {offsets = [16, 0], sizes = [8, 32], strides = [1, 1]} : vector<112x32xf32> to vector<8x32xf32>
    %69 = vector.extract_strided_slice %64 {offsets = [24, 0], sizes = [8, 32], strides = [1, 1]} : vector<112x32xf32> to vector<8x32xf32>
    %70 = arith.addf %68, %69 : vector<8x32xf32>
    %71 = vector.extract_strided_slice %64 {offsets = [32, 0], sizes = [8, 32], strides = [1, 1]} : vector<112x32xf32> to vector<8x32xf32>
    %72 = vector.extract_strided_slice %64 {offsets = [40, 0], sizes = [8, 32], strides = [1, 1]} : vector<112x32xf32> to vector<8x32xf32>
    %73 = arith.addf %71, %72 : vector<8x32xf32>
    %74 = vector.extract_strided_slice %64 {offsets = [48, 0], sizes = [8, 32], strides = [1, 1]} : vector<112x32xf32> to vector<8x32xf32>
    %75 = vector.extract_strided_slice %64 {offsets = [56, 0], sizes = [8, 32], strides = [1, 1]} : vector<112x32xf32> to vector<8x32xf32>
    %76 = arith.addf %74, %75 : vector<8x32xf32>
    %77 = vector.extract_strided_slice %64 {offsets = [64, 0], sizes = [8, 32], strides = [1, 1]} : vector<112x32xf32> to vector<8x32xf32>
    %78 = vector.extract_strided_slice %64 {offsets = [72, 0], sizes = [8, 32], strides = [1, 1]} : vector<112x32xf32> to vector<8x32xf32>
    %79 = arith.addf %77, %78 : vector<8x32xf32>
    %80 = vector.extract_strided_slice %64 {offsets = [80, 0], sizes = [8, 32], strides = [1, 1]} : vector<112x32xf32> to vector<8x32xf32>
    %81 = vector.extract_strided_slice %64 {offsets = [88, 0], sizes = [8, 32], strides = [1, 1]} : vector<112x32xf32> to vector<8x32xf32>
    %82 = arith.addf %80, %81 : vector<8x32xf32>
    %83 = vector.extract_strided_slice %64 {offsets = [96, 0], sizes = [8, 32], strides = [1, 1]} : vector<112x32xf32> to vector<8x32xf32>
    %84 = vector.extract_strided_slice %64 {offsets = [104, 0], sizes = [8, 32], strides = [1, 1]} : vector<112x32xf32> to vector<8x32xf32>
    %85 = arith.addf %83, %84 : vector<8x32xf32>
    %86 = tpu.concatenate %67, %70, %73, %76, %79, %82, %85 in 1 : vector<8x32xf32>, vector<8x32xf32>, vector<8x32xf32>, vector<8x32xf32>, vector<8x32xf32>, vector<8x32xf32>, vector<8x32xf32> -> vector<8x224xf32>
    %87 = arith.truncf %86 : vector<8x224xf32> to vector<8x224xbf16>
    %c0_40 = arith.constant 0 : index
    %c0_41 = arith.constant 0 : index
    %88 = vector.load %arg14[%c0_40, %c0_41] : memref<224x128xbf16, #tpu.memory_space<vmem>>, vector<224x128xbf16>
    %cst_42 = arith.constant dense<0.000000e+00> : vector<8x128xf32>
    %89 = tpu.matmul %87, %88, %cst_42 {dimension_numbers = #tpu.dot_dimension_numbers<[1], [0], [0], [1], [0, 0, 1, 1], [], []>} : vector<8x224xbf16>, vector<224x128xbf16>, vector<8x128xf32> -> vector<8x128xf32>
    %c0_43 = arith.constant 0 : index
    %c0_44 = arith.constant 0 : index
    %90 = vector.load %arg15[%c0_43, %c0_44] : memref<1x128xf32, #tpu.memory_space<vmem>>, vector<1x128xf32>
    %91 = vector.broadcast %90 : vector<1x128xf32> to vector<8x128xf32>
    %92 = arith.addf %89, %91 : vector<8x128xf32>
    %cst_45 = arith.constant 0.000000e+00 : f32
    %93 = vector.broadcast %cst_45 : f32 to vector<8x128xf32>
    %94 = arith.maximumf %92, %93 : vector<8x128xf32>
    %95 = arith.truncf %94 : vector<8x128xf32> to vector<8x128xbf16>
    %c0_46 = arith.constant 0 : index
    %c0_47 = arith.constant 0 : index
    %96 = vector.load %arg16[%c0_46, %c0_47] : memref<128x64xbf16, #tpu.memory_space<vmem>>, vector<128x64xbf16>
    %cst_48 = arith.constant dense<0.000000e+00> : vector<8x64xf32>
    %97 = tpu.matmul %95, %96, %cst_48 {dimension_numbers = #tpu.dot_dimension_numbers<[1], [0], [0], [1], [0, 0, 1, 1], [], []>} : vector<8x128xbf16>, vector<128x64xbf16>, vector<8x64xf32> -> vector<8x64xf32>
    %c0_49 = arith.constant 0 : index
    %c0_50 = arith.constant 0 : index
    %98 = vector.load %arg17[%c0_49, %c0_50] : memref<1x64xf32, #tpu.memory_space<vmem>>, vector<1x64xf32>
    %99 = vector.broadcast %98 : vector<1x64xf32> to vector<8x64xf32>
    %100 = arith.addf %97, %99 : vector<8x64xf32>
    %cst_51 = arith.constant 0.000000e+00 : f32
    %101 = vector.broadcast %cst_51 : f32 to vector<8x64xf32>
    %102 = arith.maximumf %100, %101 : vector<8x64xf32>
    %103 = arith.truncf %102 : vector<8x64xf32> to vector<8x64xbf16>
    %c0_52 = arith.constant 0 : index
    %c0_53 = arith.constant 0 : index
    %104 = vector.load %arg18[%c0_52, %c0_53] : memref<64x128xbf16, #tpu.memory_space<vmem>>, vector<64x128xbf16>
    %cst_54 = arith.constant dense<0.000000e+00> : vector<8x128xf32>
    %105 = tpu.matmul %103, %104, %cst_54 {dimension_numbers = #tpu.dot_dimension_numbers<[1], [0], [0], [1], [0, 0, 1, 1], [], []>} : vector<8x64xbf16>, vector<64x128xbf16>, vector<8x128xf32> -> vector<8x128xf32>
    %c0_55 = arith.constant 0 : index
    %c0_56 = arith.constant 0 : index
    %106 = vector.load %arg19[%c0_55, %c0_56] : memref<1x128xf32, #tpu.memory_space<vmem>>, vector<1x128xf32>
    %107 = vector.broadcast %106 : vector<1x128xf32> to vector<8x128xf32>
    %108 = arith.addf %105, %107 : vector<8x128xf32>
    %c0_57 = arith.constant 0 : index
    %c0_58 = arith.constant 0 : index
    %109 = vector.load %arg20[%c0_57, %c0_58] : memref<8x128xf32, #tpu.memory_space<vmem>>, vector<8x128xf32>
    tpu.vector_store %arg20[%c0_57, %c0_58], %108 {strides = array<i32>} : memref<8x128xf32, #tpu.memory_space<vmem>>, vector<8x128xf32>,
    return
  }
  func.func @transform_0(%arg0: i32) -> (i32, i32) {
    %c0_i32 = arith.constant 0 : i32
    %c0_i32_0 = arith.constant 0 : i32
    return %arg0, %c0_i32 : i32, i32
  }
  func.func @transform_1(%arg0: i32) -> (i32, i32) {
    %c0_i32 = arith.constant 0 : i32
    %c0_i32_0 = arith.constant 0 : i32
    %c0_i32_1 = arith.constant 0 : i32
    return %c0_i32, %c0_i32_0 : i32, i32
  }
  func.func @transform_2(%arg0: i32) -> (i32, i32) {
    %c0_i32 = arith.constant 0 : i32
    %c0_i32_0 = arith.constant 0 : i32
    %c0_i32_1 = arith.constant 0 : i32
    return %c0_i32, %c0_i32_0 : i32, i32
  }
  func.func @transform_3(%arg0: i32) -> (i32, i32) {
    %c0_i32 = arith.constant 0 : i32
    %c0_i32_0 = arith.constant 0 : i32
    %c0_i32_1 = arith.constant 0 : i32
    return %c0_i32, %c0_i32_0 : i32, i32
  }
  func.func @transform_4(%arg0: i32) -> (i32, i32) {
    %c0_i32 = arith.constant 0 : i32
    %c0_i32_0 = arith.constant 0 : i32
    %c0_i32_1 = arith.constant 0 : i32
    return %c0_i32, %c0_i32_0 : i32, i32
  }
  func.func @transform_5(%arg0: i32) -> (i32, i32) {
    %c0_i32 = arith.constant 0 : i32
    %c0_i32_0 = arith.constant 0 : i32
    %c0_i32_1 = arith.constant 0 : i32
    return %c0_i32, %c0_i32_0 : i32, i32
  }
  func.func @transform_6(%arg0: i32) -> (i32, i32) {
    %c0_i32 = arith.constant 0 : i32
    %c0_i32_0 = arith.constant 0 : i32
    %c0_i32_1 = arith.constant 0 : i32
    return %c0_i32, %c0_i32_0 : i32, i32
  }
  func.func @transform_7(%arg0: i32) -> (i32, i32) {
    %c0_i32 = arith.constant 0 : i32
    %c0_i32_0 = arith.constant 0 : i32
    %c0_i32_1 = arith.constant 0 : i32
    return %c0_i32, %c0_i32_0 : i32, i32
  }
  func.func @transform_8(%arg0: i32) -> (i32, i32) {
    %c0_i32 = arith.constant 0 : i32
    %c0_i32_0 = arith.constant 0 : i32
    %c0_i32_1 = arith.constant 0 : i32
    return %c0_i32, %c0_i32_0 : i32, i32
  }
  func.func @transform_9(%arg0: i32) -> (i32, i32) {
    %c0_i32 = arith.constant 0 : i32
    %c0_i32_0 = arith.constant 0 : i32
    %c0_i32_1 = arith.constant 0 : i32
    return %c0_i32, %c0_i32_0 : i32, i32
  }
  func.func @transform_10(%arg0: i32) -> (i32, i32) {
    %c0_i32 = arith.constant 0 : i32
    %c0_i32_0 = arith.constant 0 : i32
    %c0_i32_1 = arith.constant 0 : i32
    return %c0_i32, %c0_i32_0 : i32, i32
  }
  func.func @transform_11(%arg0: i32) -> (i32, i32) {
    %c0_i32 = arith.constant 0 : i32
    %c0_i32_0 = arith.constant 0 : i32
    %c0_i32_1 = arith.constant 0 : i32
    return %c0_i32, %c0_i32_0 : i32, i32
  }
  func.func @transform_12(%arg0: i32) -> (i32, i32) {
    %c0_i32 = arith.constant 0 : i32
    %c0_i32_0 = arith.constant 0 : i32
    %c0_i32_1 = arith.constant 0 : i32
    return %c0_i32, %c0_i32_0 : i32, i32
  }
  func.func @transform_13(%arg0: i32) -> (i32, i32) {
    %c0_i32 = arith.constant 0 : i32
    %c0_i32_0 = arith.constant 0 : i32
    %c0_i32_1 = arith.constant 0 : i32
    return %c0_i32, %c0_i32_0 : i32, i32
  }
  func.func @transform_14(%arg0: i32) -> (i32, i32) {
    %c0_i32 = arith.constant 0 : i32
    %c0_i32_0 = arith.constant 0 : i32
    %c0_i32_1 = arith.constant 0 : i32
    return %c0_i32, %c0_i32_0 : i32, i32
  }
  func.func @transform_15(%arg0: i32) -> (i32, i32) {
    %c0_i32 = arith.constant 0 : i32
    %c0_i32_0 = arith.constant 0 : i32
    %c0_i32_1 = arith.constant 0 : i32
    return %c0_i32, %c0_i32_0 : i32, i32
  }
  func.func @transform_16(%arg0: i32) -> (i32, i32) {
    %c0_i32 = arith.constant 0 : i32
    %c0_i32_0 = arith.constant 0 : i32
    %c0_i32_1 = arith.constant 0 : i32
    return %c0_i32, %c0_i32_0 : i32, i32
  }
  func.func @transform_17(%arg0: i32) -> (i32, i32) {
    %c0_i32 = arith.constant 0 : i32
    %c0_i32_0 = arith.constant 0 : i32
    %c0_i32_1 = arith.constant 0 : i32
    return %c0_i32, %c0_i32_0 : i32, i32
  }
  func.func @transform_18(%arg0: i32) -> (i32, i32) {
    %c0_i32 = arith.constant 0 : i32
    %c0_i32_0 = arith.constant 0 : i32
    %c0_i32_1 = arith.constant 0 : i32
    return %c0_i32, %c0_i32_0 : i32, i32
  }
  func.func @transform_19(%arg0: i32) -> (i32, i32) {
    %c0_i32 = arith.constant 0 : i32
    %c0_i32_0 = arith.constant 0 : i32
    return %arg0, %c0_i32 : i32, i32
  }
}

</mosaic_0001>

<llo_original>
// kernel: tcn_forward.1
$region0: #{tcn_forward.1}
  #allocation0 [shape = 'u32[]', space=smem, size = 0x4, offset = 0x4, fixed_abs, tag = 'smem constant byte address 0x4 - core index']
  #allocation1 [shape = 'u32[144,128]{1,0:T(1,128)}', space=vmem, size = 0x12000, scoped, tag = 'internal scratch']
  %s0 = inlined_call_operand.vmem [shape: f32[112,5], index: 0, kind: input, shape index: {}]
  %s1 = inlined_call_operand.vmem [shape: bf16[10,16], index: 1, kind: input, shape index: {}]
  %s2 = inlined_call_operand.vmem [shape: f32[1,16], index: 2, kind: input, shape index: {}]
  %s3 = inlined_call_operand.vmem [shape: bf16[32,16], index: 3, kind: input, shape index: {}]
  %s4 = inlined_call_operand.vmem [shape: f32[1,16], index: 4, kind: input, shape index: {}]
  %s5 = inlined_call_operand.vmem [shape: bf16[5,16], index: 5, kind: input, shape index: {}]
  %s6 = inlined_call_operand.vmem [shape: f32[1,16], index: 6, kind: input, shape index: {}]
  %s7 = inlined_call_operand.vmem [shape: bf16[32,32], index: 7, kind: input, shape index: {}]
  %s8 = inlined_call_operand.vmem [shape: f32[1,32], index: 8, kind: input, shape index: {}]
  %s9 = inlined_call_operand.vmem [shape: bf16[64,32], index: 9, kind: input, shape index: {}]
  %s10 = inlined_call_operand.vmem [shape: f32[1,32], index: 10, kind: input, shape index: {}]
  %s11 = inlined_call_operand.vmem [shape: bf16[16,32], index: 11, kind: input, shape index: {}]
  %s12 = inlined_call_operand.vmem [shape: f32[1,32], index: 12, kind: input, shape index: {}]
  %s13 = inlined_call_operand.vmem [shape: bf16[224,128], index: 13, kind: input, shape index: {}]
  %s14 = inlined_call_operand.vmem [shape: f32[1,128], index: 14, kind: input, shape index: {}]
  %s15 = inlined_call_operand.vmem [shape: bf16[128,64], index: 15, kind: input, shape index: {}]
  %s16 = inlined_call_operand.vmem [shape: f32[1,64], index: 16, kind: input, shape index: {}]
  %s17 = inlined_call_operand.vmem [shape: bf16[64,128], index: 17, kind: input, shape index: {}]
  %s18 = inlined_call_operand.vmem [shape: f32[1,128], index: 18, kind: input, shape index: {}]
  %s19 = inlined_call_operand.vmem [shape: f32[8,128], index: 19, kind: output, shape index: {}]
  %s20 = sld [smem:[#allocation0]]
  $region86: #{tcn_forward.1} parent=0
    _
  %s22 = ssub.s32 1, %s20
  %s23 = scalar_select 0, %s22, %s20
  // Predicated region
  $region2: #{tcn_forward.1} parent=0 // pred_check
    _
  $region3: #{tcn_forward.1} parent=0 // pred_check_branch
    %25 = sbr.rel (0) target = $region5
  $region4: #{tcn_forward.1} parent=0 // pred_region
    _
  $region5: #{tcn_forward.1} parent=0 // pred_fallthru
    _
  // Predicated region
  $region6: #{tcn_forward.1} parent=0 // pred_check
    _
  $region7: #{tcn_forward.1} parent=0 // pred_check_branch
    %27 = sbr.rel (0) target = $region9
  $region8: #{tcn_forward.1} parent=0 // pred_region
    _
  $region9: #{tcn_forward.1} parent=0 // pred_fallthru
    _
  // Predicated region
  $region10: #{tcn_forward.1} parent=0 // pred_check
    _
  $region11: #{tcn_forward.1} parent=0 // pred_check_branch
    %29 = sbr.rel (0) target = $region13
  $region12: #{tcn_forward.1} parent=0 // pred_region
    _
  $region13: #{tcn_forward.1} parent=0 // pred_fallthru
    _
  // Predicated region
  $region14: #{tcn_forward.1} parent=0 // pred_check
    _
  $region15: #{tcn_forward.1} parent=0 // pred_check_branch
    %31 = sbr.rel (0) target = $region17
  $region16: #{tcn_forward.1} parent=0 // pred_region
    _
  $region17: #{tcn_forward.1} parent=0 // pred_fallthru
    _
  // Predicated region
  $region18: #{tcn_forward.1} parent=0 // pred_check
    _
  $region19: #{tcn_forward.1} parent=0 // pred_check_branch
    %33 = sbr.rel (0) target = $region21
  $region20: #{tcn_forward.1} parent=0 // pred_region
    _
  $region21: #{tcn_forward.1} parent=0 // pred_fallthru
    _
  // Predicated region
  $region22: #{tcn_forward.1} parent=0 // pred_check
    _
  $region23: #{tcn_forward.1} parent=0 // pred_check_branch
    %35 = sbr.rel (0) target = $region25
  $region24: #{tcn_forward.1} parent=0 // pred_region
    _
  $region25: #{tcn_forward.1} parent=0 // pred_fallthru
    _
  // Predicated region
  $region26: #{tcn_forward.1} parent=0 // pred_check
    _
  $region27: #{tcn_forward.1} parent=0 // pred_check_branch
    %37 = sbr.rel (0) target = $region29
  $region28: #{tcn_forward.1} parent=0 // pred_region
    _
  $region29: #{tcn_forward.1} parent=0 // pred_fallthru
    _
  // Predicated region
  $region30: #{tcn_forward.1} parent=0 // pred_check
    _
  $region31: #{tcn_forward.1} parent=0 // pred_check_branch
    %39 = sbr.rel (0) target = $region33
  $region32: #{tcn_forward.1} parent=0 // pred_region
    _
  $region33: #{tcn_forward.1} parent=0 // pred_fallthru
    _
  // Predicated region
  $region34: #{tcn_forward.1} parent=0 // pred_check
    _
  $region35: #{tcn_forward.1} parent=0 // pred_check_branch
    %41 = sbr.rel (0) target = $region37
  $region36: #{tcn_forward.1} parent=0 // pred_region
    _
  $region37: #{tcn_forward.1} parent=0 // pred_fallthru
    _
  // Predicated region
  $region38: #{tcn_forward.1} parent=0 // pred_check
    _
  $region39: #{tcn_forward.1} parent=0 // pred_check_branch
    %43 = sbr.rel (0) target = $region41
  $region40: #{tcn_forward.1} parent=0 // pred_region
    _
  $region41: #{tcn_forward.1} parent=0 // pred_fallthru
    _
  // Predicated region
  $region42: #{tcn_forward.1} parent=0 // pred_check
    _
  $region43: #{tcn_forward.1} parent=0 // pred_check_branch
    %45 = sbr.rel (0) target = $region45
  $region44: #{tcn_forward.1} parent=0 // pred_region
    _
  $region45: #{tcn_forward.1} parent=0 // pred_fallthru
    _
  // Predicated region
  $region46: #{tcn_forward.1} parent=0 // pred_check
    _
  $region47: #{tcn_forward.1} parent=0 // pred_check_branch
    %47 = sbr.rel (0) target = $region49
  $region48: #{tcn_forward.1} parent=0 // pred_region
    _
  $region49: #{tcn_forward.1} parent=0 // pred_fallthru
    _
  // Predicated region
  $region50: #{tcn_forward.1} parent=0 // pred_check
    _
  $region51: #{tcn_forward.1} parent=0 // pred_check_branch
    %49 = sbr.rel (0) target = $region53
  $region52: #{tcn_forward.1} parent=0 // pred_region
    _
  $region53: #{tcn_forward.1} parent=0 // pred_fallthru
    _
  // Predicated region
  $region54: #{tcn_forward.1} parent=0 // pred_check
    _
  $region55: #{tcn_forward.1} parent=0 // pred_check_branch
    %51 = sbr.rel (0) target = $region57
  $region56: #{tcn_forward.1} parent=0 // pred_region
    _
  $region57: #{tcn_forward.1} parent=0 // pred_fallthru
    _
  // Predicated region
  $region58: #{tcn_forward.1} parent=0 // pred_check
    _
  $region59: #{tcn_forward.1} parent=0 // pred_check_branch
    %53 = sbr.rel (0) target = $region61
  $region60: #{tcn_forward.1} parent=0 // pred_region
    _
  $region61: #{tcn_forward.1} parent=0 // pred_fallthru
    _
  // Predicated region
  $region62: #{tcn_forward.1} parent=0 // pred_check
    _
  $region63: #{tcn_forward.1} parent=0 // pred_check_branch
    %55 = sbr.rel (0) target = $region65
  $region64: #{tcn_forward.1} parent=0 // pred_region
    _
  $region65: #{tcn_forward.1} parent=0 // pred_fallthru
    _
  // Predicated region
  $region66: #{tcn_forward.1} parent=0 // pred_check
    _
  $region67: #{tcn_forward.1} parent=0 // pred_check_branch
    %57 = sbr.rel (0) target = $region69
  $region68: #{tcn_forward.1} parent=0 // pred_region
    _
  $region69: #{tcn_forward.1} parent=0 // pred_fallthru
    _
  // Predicated region
  $region70: #{tcn_forward.1} parent=0 // pred_check
    _
  $region71: #{tcn_forward.1} parent=0 // pred_check_branch
    %59 = sbr.rel (0) target = $region73
  $region72: #{tcn_forward.1} parent=0 // pred_region
    _
  $region73: #{tcn_forward.1} parent=0 // pred_fallthru
    _
  // Predicated region
  $region74: #{tcn_forward.1} parent=0 // pred_check
    _
  $region75: #{tcn_forward.1} parent=0 // pred_check_branch
    %61 = sbr.rel (0) target = $region77
  $region76: #{tcn_forward.1} parent=0 // pred_region
    _
  $region77: #{tcn_forward.1} parent=0 // pred_fallthru
    _
  %v63 = vld [vmem:[%s0] sm:$0xff]
  %v64 = vld [vmem:[%s0 + $0x8] sm:$0xff]
  %v65 = vld [vmem:[%s0 + $0x10] sm:$0xff]
  %v66 = vld [vmem:[%s0 + $0x18] sm:$0xff]
  %v67 = vld [vmem:[%s0 + $0x20] sm:$0xff]
  %v68 = vld [vmem:[%s0 + $0x28] sm:$0xff]
  %v69 = vld [vmem:[%s0 + $0x30] sm:$0xff]
  %v70 = vld [vmem:[%s0 + $0x38] sm:$0xff]
  %v71 = vld [vmem:[%s0 + $0x40] sm:$0xff]
  %v72 = vld [vmem:[%s0 + $0x48] sm:$0xff]
  %v73 = vld [vmem:[%s0 + $0x50] sm:$0xff]
  %v74 = vld [vmem:[%s0 + $0x58] sm:$0xff]
  %v75 = vld [vmem:[%s0 + $0x60] sm:$0xff]
  %v76 = vld [vmem:[%s0 + $0x68] sm:$0xff]
  %v77 = vpack.c.bf16 %v64, %v63
  %v78 = vpack.c.bf16 %v66, %v65
  %v79 = vpack.c.bf16 %v68, %v67
  %v80 = vpack.c.bf16 %v70, %v69
  %v81 = vpack.c.bf16 %v72, %v71
  %v82 = vpack.c.bf16 %v74, %v73
  %v83 = vpack.c.bf16 %v76, %v75
  %vm91 = vcmask 1043456
  %v92 = vrot.slane %v77, 4
  %v93 = vrot.slane %v78, 4
  %v94 = vsel %vm91, %v92, %v93
  %v95 = vrot.slane %v79, 4
  %v96 = vsel %vm91, %v93, %v95
  %v97 = vrot.slane %v80, 4
  %v98 = vsel %vm91, %v95, %v97
  %v99 = vrot.slane %v81, 4
  %v100 = vsel %vm91, %v97, %v99
  %v101 = vrot.slane %v82, 4
  %v102 = vsel %vm91, %v99, %v101
  %v103 = vrot.slane %v83, 4
  %v104 = vsel %vm91, %v101, %v103
  %vm105 = vcmask 1043456
  %v108 = vsel %vm105, 0, %v92
  %109 = vrot.lane.b32.xlu0 %v77, 5
  %v110 = vpop.permute.xlu0 %109
  %111 = vrot.lane.b32.xlu0 %v78, 5
  %v112 = vpop.permute.xlu0 %111
  %113 = vrot.lane.b32.xlu0 %v79, 5
  %v114 = vpop.permute.xlu0 %113
  %115 = vrot.lane.b32.xlu0 %v80, 5
  %v116 = vpop.permute.xlu0 %115
  %117 = vrot.lane.b32.xlu0 %v81, 5
  %v118 = vpop.permute.xlu0 %117
  %119 = vrot.lane.b32.xlu0 %v82, 5
  %v120 = vpop.permute.xlu0 %119
  %121 = vrot.lane.b32.xlu0 %v83, 5
  %v122 = vpop.permute.xlu0 %121
  %vm123 = vcmask 39936
  %v125 = vsel %vm123, %v108, %v110
  %v128 = vsel %vm123, %v94, %v112
  %v131 = vsel %vm123, %v96, %v114
  %v134 = vsel %vm123, %v98, %v116
  %v137 = vsel %vm123, %v100, %v118
  %v140 = vsel %vm123, %v102, %v120
  %v143 = vsel %vm123, %v104, %v122
  %v144 = vld [vmem:[%s1] sm:$0xf]
  %v145 = vld [vmem:[%s1 + $0x4] sm:$0x1]
  %v146 = vld [vmem:[%s2] sm:$0x1]
  %v148 = vlaneseq
  %v149 = vshrl.u32 %v148, 7
  %v150 = vsub.s32 0, %v149
  %v151 = vrot.slane %v146, %v150
  %v155 = vunpack.c.l.b16 %v144
  %v156 = vunpack.c.l.b16 %v145
  %v157 = vpack.c.b16 %v156, %v155
  %vm158 = vcmask 80896
  %v159 = vsel %vm158, %v125, 0
  %v161 = vsel %vm158, %v128, 0
  %v163 = vsel %vm158, %v131, 0
  %v165 = vsel %vm158, %v134, 0
  %v167 = vsel %vm158, %v137, 0
  %v169 = vsel %vm158, %v140, 0
  %v171 = vsel %vm158, %v143, 0
  %vm173 = vcmask 1044480
  %v175 = vsel %vm173, %v157, 0
  %177 = vmatprep.subr.bf16.mxu0 0
  %178 = vmatpush1.bf16.msra.mxu0 0
  %179 = vmatprep.subr.bf16.mxu0 0
  %180 = vmatpush1.bf16.msra.mxu0 0
  %181 = vmatprep.subr.bf16.mxu0 0
  %182 = vmatpush1.bf16.msra.mxu0 0
  %183 = vmatprep.subr.bf16.mxu0 0
  %184 = vmatpush1.bf16.msra.mxu0 0
  %185 = vmatprep.subr.bf16.mxu0 0
  %186 = vmatpush1.bf16.msra.mxu0 0
  %187 = vmatprep.subr.bf16.mxu0 0
  %188 = vmatpush1.bf16.msra.mxu0 0
  %189 = vmatprep.subr.bf16.mxu0 0
  %190 = vmatpush1.bf16.msra.mxu0 0
  %191 = vmatprep.subr.bf16.mxu0 0
  %192 = vmatpush1.bf16.msra.mxu0 %v175
  %193 = vmatprep.subr.bf16.mxu0 0
  %194 = vmatpush2.bf16.msra.mxu0 0
  %195 = vmatprep.subr.bf16.mxu0 0
  %196 = vmatpush2.bf16.msra.mxu0 0
  %197 = vmatprep.subr.bf16.mxu0 0
  %198 = vmatpush2.bf16.msra.mxu0 0
  %199 = vmatprep.subr.bf16.mxu0 0
  %200 = vmatpush2.bf16.msra.mxu0 0
  %201 = vmatprep.subr.bf16.mxu0 0
  %202 = vmatpush2.bf16.msra.mxu0 0
  %203 = vmatprep.subr.bf16.mxu0 0
  %204 = vmatpush2.bf16.msra.mxu0 0
  %205 = vmatprep.subr.bf16.mxu0 0
  %206 = vmatpush2.bf16.msra.mxu0 0
  %207 = vmatprep.subr.bf16.mxu0 0
  %208 = vmatpush2.bf16.msra.mxu0 0
  %209 = vmatprep.mubr.bf16.mxu0 0
  %210 = vmatmul.mubr.bf16.gmra.mxu0 %v159
  %v211 = vpop.f32.mrf.mxu0
  %v212 = vadd.f32 %v151, %v211
  %v213 = vpop.f32.mrf.mxu0
  %v214 = vpop.f32.mrf.mxu0
  %v215 = vadd.f32 %v151, %v214
  %v216 = vpop.f32.mrf.mxu0
  %217 = vmatprep.mubr.bf16.mxu0 0
  %218 = vmatmul.mubr.bf16.gmra.mxu0 %v161
  %v219 = vpop.f32.mrf.mxu0
  %v220 = vadd.f32 %v151, %v219
  %v221 = vpop.f32.mrf.mxu0
  %v222 = vpop.f32.mrf.mxu0
  %v223 = vadd.f32 %v151, %v222
  %v224 = vpop.f32.mrf.mxu0
  %225 = vmatprep.mubr.bf16.mxu0 0
  %226 = vmatmul.mubr.bf16.gmra.mxu0 %v163
  %v227 = vpop.f32.mrf.mxu0
  %v228 = vadd.f32 %v151, %v227
  %v229 = vpop.f32.mrf.mxu0
  %v230 = vpop.f32.mrf.mxu0
  %v231 = vadd.f32 %v151, %v230
  %v232 = vpop.f32.mrf.mxu0
  %233 = vmatprep.mubr.bf16.mxu0 0
  %234 = vmatmul.mubr.bf16.gmra.mxu0 %v165
  %v235 = vpop.f32.mrf.mxu0
  %v236 = vadd.f32 %v151, %v235
  %v237 = vpop.f32.mrf.mxu0
  %v238 = vpop.f32.mrf.mxu0
  %v239 = vadd.f32 %v151, %v238
  %v240 = vpop.f32.mrf.mxu0
  %241 = vmatprep.mubr.bf16.mxu0 0
  %242 = vmatmul.mubr.bf16.gmra.mxu0 %v167
  %v243 = vpop.f32.mrf.mxu0
  %v244 = vadd.f32 %v151, %v243
  %v245 = vpop.f32.mrf.mxu0
  %v246 = vpop.f32.mrf.mxu0
  %v247 = vadd.f32 %v151, %v246
  %v248 = vpop.f32.mrf.mxu0
  %249 = vmatprep.mubr.bf16.mxu0 0
  %250 = vmatmul.mubr.bf16.gmra.mxu0 %v169
  %v251 = vpop.f32.mrf.mxu0
  %v252 = vadd.f32 %v151, %v251
  %v253 = vpop.f32.mrf.mxu0
  %v254 = vpop.f32.mrf.mxu0
  %v255 = vadd.f32 %v151, %v254
  %v256 = vpop.f32.mrf.mxu0
  %257 = vmatprep.mubr.bf16.mxu0 0
  %258 = vmatmul.mubr.bf16.gmra.mxu0 %v171
  %v259 = vpop.f32.mrf.mxu0
  %v260 = vadd.f32 %v151, %v259
  %v261 = vpop.f32.mrf.mxu0
  %v262 = vpop.f32.mrf.mxu0
  %v263 = vadd.f32 %v151, %v262
  %v264 = vpop.f32.mrf.mxu0
  %265 = vdwg.mxu0
  %v266 = vmax.f32 %v212, 0.0
  %v267 = vmax.f32 %v215, 0.0
  %v268 = vmax.f32 %v220, 0.0
  %v269 = vmax.f32 %v223, 0.0
  %v270 = vmax.f32 %v228, 0.0
  %v271 = vmax.f32 %v231, 0.0
  %v272 = vmax.f32 %v236, 0.0
  %v273 = vmax.f32 %v239, 0.0
  %v274 = vmax.f32 %v244, 0.0
  %v275 = vmax.f32 %v247, 0.0
  %v276 = vmax.f32 %v252, 0.0
  %v277 = vmax.f32 %v255, 0.0
  %v278 = vmax.f32 %v260, 0.0
  %v279 = vmax.f32 %v263, 0.0
  %v280 = vpack.c.bf16 %v267, %v266
  %v281 = vpack.c.bf16 %v269, %v268
  %v282 = vpack.c.bf16 %v271, %v270
  %v283 = vpack.c.bf16 %v273, %v272
  %v284 = vpack.c.bf16 %v275, %v274
  %v285 = vpack.c.bf16 %v277, %v276
  %v286 = vpack.c.bf16 %v279, %v278
  %v294 = vrot.slane %v280, 4
  %v295 = vrot.slane %v281, 4
  %v296 = vsel %vm91, %v294, %v295
  %v297 = vrot.slane %v282, 4
  %v298 = vsel %vm91, %v295, %v297
  %v299 = vrot.slane %v283, 4
  %v300 = vsel %vm91, %v297, %v299
  %v301 = vrot.slane %v284, 4
  %v302 = vsel %vm91, %v299, %v301
  %v303 = vrot.slane %v285, 4
  %v304 = vsel %vm91, %v301, %v303
  %v305 = vrot.slane %v286, 4
  %v306 = vsel %vm91, %v303, %v305
  %v308 = vsel %vm105, 0, %v294
  %309 = vrot.lane.b32.xlu0 %v280, 16
  %v310 = vpop.permute.xlu0 %309
  %311 = vrot.lane.b32.xlu0 %v281, 16
  %v312 = vpop.permute.xlu0 %311
  %313 = vrot.lane.b32.xlu0 %v282, 16
  %v314 = vpop.permute.xlu0 %313
  %315 = vrot.lane.b32.xlu0 %v283, 16
  %v316 = vpop.permute.xlu0 %315
  %317 = vrot.lane.b32.xlu0 %v284, 16
  %v318 = vpop.permute.xlu0 %317
  %319 = vrot.lane.b32.xlu0 %v285, 16
  %v320 = vpop.permute.xlu0 %319
  %321 = vrot.lane.b32.xlu0 %v286, 16
  %v322 = vpop.permute.xlu0 %321
  %vm323 = vcmask 130048
  %v325 = vsel %vm323, %v308, %v310
  %v328 = vsel %vm323, %v296, %v312
  %v331 = vsel %vm323, %v298, %v314
  %v334 = vsel %vm323, %v300, %v316
  %v337 = vsel %vm323, %v302, %v318
  %v340 = vsel %vm323, %v304, %v320
  %v343 = vsel %vm323, %v306, %v322
  %v344 = vld [vmem:[%s3] sm:$0xf]
  %v345 = vld [vmem:[%s3 + $0x4] sm:$0xf]
  %v346 = vld [vmem:[%s3 + $0x8] sm:$0xf]
  %v347 = vld [vmem:[%s3 + $0xc] sm:$0xf]
  %v348 = vld [vmem:[%s4] sm:$0x1]
  %v350 = vlaneseq
  %v351 = vshrl.u32 %v350, 7
  %v352 = vsub.s32 0, %v351
  %v353 = vrot.slane %v348, %v352
  %v359 = vunpack.c.l.b16 %v344
  %v360 = vunpack.c.l.b16 %v345
  %v361 = vunpack.c.l.b16 %v346
  %v362 = vunpack.c.l.b16 %v347
  %v363 = vpack.c.b16 %v360, %v359
  %v364 = vpack.c.b16 %v362, %v361
  %vm367 = vcmask 261120
  %v368 = vsel %vm367, %v325, 0
  %v370 = vsel %vm367, %v328, 0
  %v372 = vsel %vm367, %v331, 0
  %v374 = vsel %vm367, %v334, 0
  %v376 = vsel %vm367, %v337, 0
  %v378 = vsel %vm367, %v340, 0
  %v380 = vsel %vm367, %v343, 0
  %382 = vmatprep.subr.bf16.mxu0 0
  %383 = vmatpush1.bf16.msra.mxu0 0
  %384 = vmatprep.subr.bf16.mxu0 0
  %385 = vmatpush1.bf16.msra.mxu0 0
  %386 = vmatprep.subr.bf16.mxu0 0
  %387 = vmatpush1.bf16.msra.mxu0 0
  %388 = vmatprep.subr.bf16.mxu0 0
  %389 = vmatpush1.bf16.msra.mxu0 0
  %390 = vmatprep.subr.bf16.mxu0 0
  %391 = vmatpush1.bf16.msra.mxu0 0
  %392 = vmatprep.subr.bf16.mxu0 0
  %393 = vmatpush1.bf16.msra.mxu0 0
  %394 = vmatprep.subr.bf16.mxu0 0
  %395 = vmatpush1.bf16.msra.mxu0 %v364
  %396 = vmatprep.subr.bf16.mxu0 0
  %397 = vmatpush1.bf16.msra.mxu0 %v363
  %398 = vmatprep.subr.bf16.mxu0 0
  %399 = vmatpush2.bf16.msra.mxu0 0
  %400 = vmatprep.subr.bf16.mxu0 0
  %401 = vmatpush2.bf16.msra.mxu0 0
  %402 = vmatprep.subr.bf16.mxu0 0
  %403 = vmatpush2.bf16.msra.mxu0 0
  %404 = vmatprep.subr.bf16.mxu0 0
  %405 = vmatpush2.bf16.msra.mxu0 0
  %406 = vmatprep.subr.bf16.mxu0 0
  %407 = vmatpush2.bf16.msra.mxu0 0
  %408 = vmatprep.subr.bf16.mxu0 0
  %409 = vmatpush2.bf16.msra.mxu0 0
  %410 = vmatprep.subr.bf16.mxu0 0
  %411 = vmatpush2.bf16.msra.mxu0 0
  %412 = vmatprep.subr.bf16.mxu0 0
  %413 = vmatpush2.bf16.msra.mxu0 0
  %414 = vmatprep.mubr.bf16.mxu0 0
  %415 = vmatmul.mubr.bf16.gmra.mxu0 %v368
  %v416 = vpop.f32.mrf.mxu0
  %v417 = vadd.f32 %v353, %v416
  %v418 = vpop.f32.mrf.mxu0
  %v419 = vpop.f32.mrf.mxu0
  %v420 = vadd.f32 %v353, %v419
  %v421 = vpop.f32.mrf.mxu0
  %422 = vmatprep.mubr.bf16.mxu0 0
  %423 = vmatmul.mubr.bf16.gmra.mxu0 %v370
  %v424 = vpop.f32.mrf.mxu0
  %v425 = vadd.f32 %v353, %v424
  %v426 = vpop.f32.mrf.mxu0
  %v427 = vpop.f32.mrf.mxu0
  %v428 = vadd.f32 %v353, %v427
  %v429 = vpop.f32.mrf.mxu0
  %430 = vmatprep.mubr.bf16.mxu0 0
  %431 = vmatmul.mubr.bf16.gmra.mxu0 %v372
  %v432 = vpop.f32.mrf.mxu0
  %v433 = vadd.f32 %v353, %v432
  %v434 = vpop.f32.mrf.mxu0
  %v435 = vpop.f32.mrf.mxu0
  %v436 = vadd.f32 %v353, %v435
  %v437 = vpop.f32.mrf.mxu0
  %438 = vmatprep.mubr.bf16.mxu0 0
  %439 = vmatmul.mubr.bf16.gmra.mxu0 %v374
  %v440 = vpop.f32.mrf.mxu0
  %v441 = vadd.f32 %v353, %v440
  %v442 = vpop.f32.mrf.mxu0
  %v443 = vpop.f32.mrf.mxu0
  %v444 = vadd.f32 %v353, %v443
  %v445 = vpop.f32.mrf.mxu0
  %446 = vmatprep.mubr.bf16.mxu0 0
  %447 = vmatmul.mubr.bf16.gmra.mxu0 %v376
  %v448 = vpop.f32.mrf.mxu0
  %v449 = vadd.f32 %v353, %v448
  %v450 = vpop.f32.mrf.mxu0
  %v451 = vpop.f32.mrf.mxu0
  %v452 = vadd.f32 %v353, %v451
  %v453 = vpop.f32.mrf.mxu0
  %454 = vmatprep.mubr.bf16.mxu0 0
  %455 = vmatmul.mubr.bf16.gmra.mxu0 %v378
  %v456 = vpop.f32.mrf.mxu0
  %v457 = vadd.f32 %v353, %v456
  %v458 = vpop.f32.mrf.mxu0
  %v459 = vpop.f32.mrf.mxu0
  %v460 = vadd.f32 %v353, %v459
  %v461 = vpop.f32.mrf.mxu0
  %462 = vmatprep.mubr.bf16.mxu0 0
  %463 = vmatmul.mubr.bf16.gmra.mxu0 %v380
  %v464 = vpop.f32.mrf.mxu0
  %v465 = vadd.f32 %v353, %v464
  %v466 = vpop.f32.mrf.mxu0
  %v467 = vpop.f32.mrf.mxu0
  %v468 = vadd.f32 %v353, %v467
  %v469 = vpop.f32.mrf.mxu0
  %470 = vdwg.mxu0
  %v471 = vmax.f32 %v417, 0.0
  %v472 = vmax.f32 %v420, 0.0
  %v473 = vmax.f32 %v425, 0.0
  %v474 = vmax.f32 %v428, 0.0
  %v475 = vmax.f32 %v433, 0.0
  %v476 = vmax.f32 %v436, 0.0
  %v477 = vmax.f32 %v441, 0.0
  %v478 = vmax.f32 %v444, 0.0
  %v479 = vmax.f32 %v449, 0.0
  %v480 = vmax.f32 %v452, 0.0
  %v481 = vmax.f32 %v457, 0.0
  %v482 = vmax.f32 %v460, 0.0
  %v483 = vmax.f32 %v465, 0.0
  %v484 = vmax.f32 %v468, 0.0
  %v485 = vld [vmem:[%s5] sm:$0x7]
  %v486 = vld [vmem:[%s6] sm:$0x1]
  %v488 = vlaneseq
  %v489 = vshrl.u32 %v488, 7
  %v490 = vsub.s32 0, %v489
  %v491 = vrot.slane %v486, %v490
  %v494 = vsel %vm123, %v77, 0
  %v497 = vsel %vm123, %v78, 0
  %v500 = vsel %vm123, %v79, 0
  %v503 = vsel %vm123, %v80, 0
  %v506 = vsel %vm123, %v81, 0
  %v509 = vsel %vm123, %v82, 0
  %v512 = vsel %vm123, %v83, 0
  %vm514 = vcmask 1041408
  %vm515 = vcmask 1042432
  %v516 = vsel %vm514, 4294967295, 65535
  %v517 = vsel %vm515, %v516, 0
  %v519 = vand.u32 %v485, %v517
  %521 = vmatprep.subr.bf16.mxu0 0
  %522 = vmatpush1.bf16.msra.mxu0 0
  %523 = vmatprep.subr.bf16.mxu0 0
  %524 = vmatpush1.bf16.msra.mxu0 0
  %525 = vmatprep.subr.bf16.mxu0 0
  %526 = vmatpush1.bf16.msra.mxu0 0
  %527 = vmatprep.subr.bf16.mxu0 0
  %528 = vmatpush1.bf16.msra.mxu0 0
  %529 = vmatprep.subr.bf16.mxu0 0
  %530 = vmatpush1.bf16.msra.mxu0 0
  %531 = vmatprep.subr.bf16.mxu0 0
  %532 = vmatpush1.bf16.msra.mxu0 0
  %533 = vmatprep.subr.bf16.mxu0 0
  %534 = vmatpush1.bf16.msra.mxu0 0
  %535 = vmatprep.subr.bf16.mxu0 0
  %536 = vmatpush1.bf16.msra.mxu0 %v519
  %537 = vmatprep.subr.bf16.mxu0 0
  %538 = vmatpush2.bf16.msra.mxu0 0
  %539 = vmatprep.subr.bf16.mxu0 0
  %540 = vmatpush2.bf16.msra.mxu0 0
  %541 = vmatprep.subr.bf16.mxu0 0
  %542 = vmatpush2.bf16.msra.mxu0 0
  %543 = vmatprep.subr.bf16.mxu0 0
  %544 = vmatpush2.bf16.msra.mxu0 0
  %545 = vmatprep.subr.bf16.mxu0 0
  %546 = vmatpush2.bf16.msra.mxu0 0
  %547 = vmatprep.subr.bf16.mxu0 0
  %548 = vmatpush2.bf16.msra.mxu0 0
  %549 = vmatprep.subr.bf16.mxu0 0
  %550 = vmatpush2.bf16.msra.mxu0 0
  %551 = vmatprep.subr.bf16.mxu0 0
  %552 = vmatpush2.bf16.msra.mxu0 0
  %553 = vmatprep.mubr.bf16.mxu0 0
  %554 = vmatmul.mubr.bf16.gmra.mxu0 %v494
  %v555 = vpop.f32.mrf.mxu0
  %v556 = vadd.f32 %v491, %v555
  %v557 = vpop.f32.mrf.mxu0
  %v558 = vpop.f32.mrf.mxu0
  %v559 = vadd.f32 %v491, %v558
  %v560 = vpop.f32.mrf.mxu0
  %561 = vmatprep.mubr.bf16.mxu0 0
  %562 = vmatmul.mubr.bf16.gmra.mxu0 %v497
  %v563 = vpop.f32.mrf.mxu0
  %v564 = vadd.f32 %v491, %v563
  %v565 = vpop.f32.mrf.mxu0
  %v566 = vpop.f32.mrf.mxu0
  %v567 = vadd.f32 %v491, %v566
  %v568 = vpop.f32.mrf.mxu0
  %569 = vmatprep.mubr.bf16.mxu0 0
  %570 = vmatmul.mubr.bf16.gmra.mxu0 %v500
  %v571 = vpop.f32.mrf.mxu0
  %v572 = vadd.f32 %v491, %v571
  %v573 = vpop.f32.mrf.mxu0
  %v574 = vpop.f32.mrf.mxu0
  %v575 = vadd.f32 %v491, %v574
  %v576 = vpop.f32.mrf.mxu0
  %577 = vmatprep.mubr.bf16.mxu0 0
  %578 = vmatmul.mubr.bf16.gmra.mxu0 %v503
  %v579 = vpop.f32.mrf.mxu0
  %v580 = vadd.f32 %v491, %v579
  %v581 = vpop.f32.mrf.mxu0
  %v582 = vpop.f32.mrf.mxu0
  %v583 = vadd.f32 %v491, %v582
  %v584 = vpop.f32.mrf.mxu0
  %585 = vmatprep.mubr.bf16.mxu0 0
  %586 = vmatmul.mubr.bf16.gmra.mxu0 %v506
  %v587 = vpop.f32.mrf.mxu0
  %v588 = vadd.f32 %v491, %v587
  %v589 = vpop.f32.mrf.mxu0
  %v590 = vpop.f32.mrf.mxu0
  %v591 = vadd.f32 %v491, %v590
  %v592 = vpop.f32.mrf.mxu0
  %593 = vmatprep.mubr.bf16.mxu0 0
  %594 = vmatmul.mubr.bf16.gmra.mxu0 %v509
  %v595 = vpop.f32.mrf.mxu0
  %v596 = vadd.f32 %v491, %v595
  %v597 = vpop.f32.mrf.mxu0
  %v598 = vpop.f32.mrf.mxu0
  %v599 = vadd.f32 %v491, %v598
  %v600 = vpop.f32.mrf.mxu0
  %601 = vmatprep.mubr.bf16.mxu0 0
  %602 = vmatmul.mubr.bf16.gmra.mxu0 %v512
  %v603 = vpop.f32.mrf.mxu0
  %v604 = vadd.f32 %v491, %v603
  %v605 = vpop.f32.mrf.mxu0
  %v606 = vpop.f32.mrf.mxu0
  %v607 = vadd.f32 %v491, %v606
  %v608 = vpop.f32.mrf.mxu0
  %609 = vdwg.mxu0
  %v610 = vadd.f32 %v471, %v556
  %v611 = vadd.f32 %v472, %v559
  %v612 = vadd.f32 %v473, %v564
  %v613 = vadd.f32 %v474, %v567
  %v614 = vadd.f32 %v475, %v572
  %v615 = vadd.f32 %v476, %v575
  %v616 = vadd.f32 %v477, %v580
  %v617 = vadd.f32 %v478, %v583
  %v618 = vadd.f32 %v479, %v588
  %v619 = vadd.f32 %v480, %v591
  %v620 = vadd.f32 %v481, %v596
  %v621 = vadd.f32 %v482, %v599
  %v622 = vadd.f32 %v483, %v604
  %v623 = vadd.f32 %v484, %v607
  %v624 = vmax.f32 %v610, 0.0
  %v625 = vmax.f32 %v611, 0.0
  %v626 = vmax.f32 %v612, 0.0
  %v627 = vmax.f32 %v613, 0.0
  %v628 = vmax.f32 %v614, 0.0
  %v629 = vmax.f32 %v615, 0.0
  %v630 = vmax.f32 %v616, 0.0
  %v631 = vmax.f32 %v617, 0.0
  %v632 = vmax.f32 %v618, 0.0
  %v633 = vmax.f32 %v619, 0.0
  %v634 = vmax.f32 %v620, 0.0
  %v635 = vmax.f32 %v621, 0.0
  %v636 = vmax.f32 %v622, 0.0
  %v637 = vmax.f32 %v623, 0.0
  %v638 = vpack.c.bf16 %v625, %v624
  %v639 = vpack.c.bf16 %v627, %v626
  %v640 = vpack.c.bf16 %v629, %v628
  %v641 = vpack.c.bf16 %v631, %v630
  %v642 = vpack.c.bf16 %v633, %v632
  %v643 = vpack.c.bf16 %v635, %v634
  %v644 = vpack.c.bf16 %v637, %v636
  %652 = vrot.lane.b32.xlu0 %v638, 16
  %v653 = vpop.permute.xlu0 %652
  %654 = vrot.lane.b32.xlu0 %v639, 16
  %v655 = vpop.permute.xlu0 %654
  %656 = vrot.lane.b32.xlu0 %v640, 16
  %v657 = vpop.permute.xlu0 %656
  %658 = vrot.lane.b32.xlu0 %v641, 16
  %v659 = vpop.permute.xlu0 %658
  %660 = vrot.lane.b32.xlu0 %v642, 16
  %v661 = vpop.permute.xlu0 %660
  %662 = vrot.lane.b32.xlu0 %v643, 16
  %v663 = vpop.permute.xlu0 %662
  %664 = vrot.lane.b32.xlu0 %v644, 16
  %v665 = vpop.permute.xlu0 %664
  %v667 = vsel %vm323, 0, %v653
  %v670 = vsel %vm323, %v638, %v655
  %v673 = vsel %vm323, %v639, %v657
  %v676 = vsel %vm323, %v640, %v659
  %v679 = vsel %vm323, %v641, %v661
  %v682 = vsel %vm323, %v642, %v663
  %v685 = vsel %vm323, %v643, %v665
  %v686 = vld [vmem:[%s7] sm:$0xf]
  %v687 = vld [vmem:[%s7 + $0x4] sm:$0xf]
  %v688 = vld [vmem:[%s7 + $0x8] sm:$0xf]
  %v689 = vld [vmem:[%s7 + $0xc] sm:$0xf]
  %v690 = vld [vmem:[%s8] sm:$0x1]
  %v692 = vlaneseq
  %v693 = vshrl.u32 %v692, 7
  %v694 = vsub.s32 0, %v693
  %v695 = vrot.slane %v690, %v694
  %v701 = vunpack.c.l.b16 %v686
  %v702 = vunpack.c.l.b16 %v687
  %v703 = vunpack.c.l.b16 %v688
  %v704 = vunpack.c.l.b16 %v689
  %v705 = vpack.c.b16 %v702, %v701
  %v706 = vpack.c.b16 %v704, %v703
  %v709 = vsel %vm367, %v667, 0
  %v711 = vsel %vm367, %v670, 0
  %v713 = vsel %vm367, %v673, 0
  %v715 = vsel %vm367, %v676, 0
  %v717 = vsel %vm367, %v679, 0
  %v719 = vsel %vm367, %v682, 0
  %v721 = vsel %vm367, %v685, 0
  %723 = vmatprep.subr.bf16.mxu0 0
  %724 = vmatpush1.bf16.msra.mxu0 0
  %725 = vmatprep.subr.bf16.mxu0 0
  %726 = vmatpush1.bf16.msra.mxu0 0
  %727 = vmatprep.subr.bf16.mxu0 0
  %728 = vmatpush1.bf16.msra.mxu0 0
  %729 = vmatprep.subr.bf16.mxu0 0
  %730 = vmatpush1.bf16.msra.mxu0 0
  %731 = vmatprep.subr.bf16.mxu0 0
  %732 = vmatpush1.bf16.msra.mxu0 0
  %733 = vmatprep.subr.bf16.mxu0 0
  %734 = vmatpush1.bf16.msra.mxu0 0
  %735 = vmatprep.subr.bf16.mxu0 0
  %736 = vmatpush1.bf16.msra.mxu0 %v706
  %737 = vmatprep.subr.bf16.mxu0 0
  %738 = vmatpush1.bf16.msra.mxu0 %v705
  %739 = vmatprep.subr.bf16.mxu0 0
  %740 = vmatpush2.bf16.msra.mxu0 0
  %741 = vmatprep.subr.bf16.mxu0 0
  %742 = vmatpush2.bf16.msra.mxu0 0
  %743 = vmatprep.subr.bf16.mxu0 0
  %744 = vmatpush2.bf16.msra.mxu0 0
  %745 = vmatprep.subr.bf16.mxu0 0
  %746 = vmatpush2.bf16.msra.mxu0 0
  %747 = vmatprep.subr.bf16.mxu0 0
  %748 = vmatpush2.bf16.msra.mxu0 0
  %749 = vmatprep.subr.bf16.mxu0 0
  %750 = vmatpush2.bf16.msra.mxu0 0
  %751 = vmatprep.subr.bf16.mxu0 0
  %752 = vmatpush2.bf16.msra.mxu0 0
  %753 = vmatprep.subr.bf16.mxu0 0
  %754 = vmatpush2.bf16.msra.mxu0 0
  %755 = vmatprep.mubr.bf16.mxu0 0
  %756 = vmatmul.mubr.bf16.gmra.mxu0 %v709
  %v757 = vpop.f32.mrf.mxu0
  %v758 = vadd.f32 %v695, %v757
  %v759 = vpop.f32.mrf.mxu0
  %v760 = vpop.f32.mrf.mxu0
  %v761 = vadd.f32 %v695, %v760
  %v762 = vpop.f32.mrf.mxu0
  %763 = vmatprep.mubr.bf16.mxu0 0
  %764 = vmatmul.mubr.bf16.gmra.mxu0 %v711
  %v765 = vpop.f32.mrf.mxu0
  %v766 = vadd.f32 %v695, %v765
  %v767 = vpop.f32.mrf.mxu0
  %v768 = vpop.f32.mrf.mxu0
  %v769 = vadd.f32 %v695, %v768
  %v770 = vpop.f32.mrf.mxu0
  %771 = vmatprep.mubr.bf16.mxu0 0
  %772 = vmatmul.mubr.bf16.gmra.mxu0 %v713
  %v773 = vpop.f32.mrf.mxu0
  %v774 = vadd.f32 %v695, %v773
  %v775 = vpop.f32.mrf.mxu0
  %v776 = vpop.f32.mrf.mxu0
  %v777 = vadd.f32 %v695, %v776
  %v778 = vpop.f32.mrf.mxu0
  %779 = vmatprep.mubr.bf16.mxu0 0
  %780 = vmatmul.mubr.bf16.gmra.mxu0 %v715
  %v781 = vpop.f32.mrf.mxu0
  %v782 = vadd.f32 %v695, %v781
  %v783 = vpop.f32.mrf.mxu0
  %v784 = vpop.f32.mrf.mxu0
  %v785 = vadd.f32 %v695, %v784
  %v786 = vpop.f32.mrf.mxu0
  %787 = vmatprep.mubr.bf16.mxu0 0
  %788 = vmatmul.mubr.bf16.gmra.mxu0 %v717
  %v789 = vpop.f32.mrf.mxu0
  %v790 = vadd.f32 %v695, %v789
  %v791 = vpop.f32.mrf.mxu0
  %v792 = vpop.f32.mrf.mxu0
  %v793 = vadd.f32 %v695, %v792
  %v794 = vpop.f32.mrf.mxu0
  %795 = vmatprep.mubr.bf16.mxu0 0
  %796 = vmatmul.mubr.bf16.gmra.mxu0 %v719
  %v797 = vpop.f32.mrf.mxu0
  %v798 = vadd.f32 %v695, %v797
  %v799 = vpop.f32.mrf.mxu0
  %v800 = vpop.f32.mrf.mxu0
  %v801 = vadd.f32 %v695, %v800
  %v802 = vpop.f32.mrf.mxu0
  %803 = vmatprep.mubr.bf16.mxu0 0
  %804 = vmatmul.mubr.bf16.gmra.mxu0 %v721
  %v805 = vpop.f32.mrf.mxu0
  %v806 = vadd.f32 %v695, %v805
  %v807 = vpop.f32.mrf.mxu0
  %v808 = vpop.f32.mrf.mxu0
  %v809 = vadd.f32 %v695, %v808
  %v810 = vpop.f32.mrf.mxu0
  %811 = vdwg.mxu0
  %v812 = vmax.f32 %v758, 0.0
  %v813 = vmax.f32 %v761, 0.0
  %v814 = vmax.f32 %v766, 0.0
  %v815 = vmax.f32 %v769, 0.0
  %v816 = vmax.f32 %v774, 0.0
  %v817 = vmax.f32 %v777, 0.0
  %v818 = vmax.f32 %v782, 0.0
  %v819 = vmax.f32 %v785, 0.0
  %v820 = vmax.f32 %v790, 0.0
  %v821 = vmax.f32 %v793, 0.0
  %v822 = vmax.f32 %v798, 0.0
  %v823 = vmax.f32 %v801, 0.0
  %v824 = vmax.f32 %v806, 0.0
  %v825 = vmax.f32 %v809, 0.0
  %v826 = vpack.c.bf16 %v813, %v812
  %v827 = vpack.c.bf16 %v815, %v814
  %v828 = vpack.c.bf16 %v817, %v816
  %v829 = vpack.c.bf16 %v819, %v818
  %v830 = vpack.c.bf16 %v821, %v820
  %v831 = vpack.c.bf16 %v823, %v822
  %v832 = vpack.c.bf16 %v825, %v824
  %840 = vrot.lane.b32.xlu0 %v826, 32
  %v841 = vpop.permute.xlu0 %840
  %842 = vrot.lane.b32.xlu0 %v827, 32
  %v843 = vpop.permute.xlu0 %842
  %844 = vrot.lane.b32.xlu0 %v828, 32
  %v845 = vpop.permute.xlu0 %844
  %846 = vrot.lane.b32.xlu0 %v829, 32
  %v847 = vpop.permute.xlu0 %846
  %848 = vrot.lane.b32.xlu0 %v830, 32
  %v849 = vpop.permute.xlu0 %848
  %850 = vrot.lane.b32.xlu0 %v831, 32
  %v851 = vpop.permute.xlu0 %850
  %852 = vrot.lane.b32.xlu0 %v832, 32
  %v853 = vpop.permute.xlu0 %852
  %v855 = vsel %vm367, 0, %v841
  %v858 = vsel %vm367, %v826, %v843
  %v861 = vsel %vm367, %v827, %v845
  %v864 = vsel %vm367, %v828, %v847
  %v867 = vsel %vm367, %v829, %v849
  %v870 = vsel %vm367, %v830, %v851
  %v873 = vsel %vm367, %v831, %v853
  %v874 = vld [vmem:[%s9] sm:$0xf]
  %v875 = vld [vmem:[%s9 + $0x4] sm:$0xf]
  %v876 = vld [vmem:[%s9 + $0x8] sm:$0xf]
  %v877 = vld [vmem:[%s9 + $0xc] sm:$0xf]
  %v878 = vld [vmem:[%s9 + $0x10] sm:$0xf]
  %v879 = vld [vmem:[%s9 + $0x14] sm:$0xf]
  %v880 = vld [vmem:[%s9 + $0x18] sm:$0xf]
  %v881 = vld [vmem:[%s9 + $0x1c] sm:$0xf]
  %v882 = vld [vmem:[%s10] sm:$0x1]
  %v884 = vlaneseq
  %v885 = vshrl.u32 %v884, 7
  %v886 = vsub.s32 0, %v885
  %v887 = vrot.slane %v882, %v886
  %v897 = vunpack.c.l.b16 %v874
  %v898 = vunpack.c.l.b16 %v875
  %v899 = vunpack.c.l.b16 %v876
  %v900 = vunpack.c.l.b16 %v877
  %v901 = vunpack.c.l.b16 %v878
  %v902 = vunpack.c.l.b16 %v879
  %v903 = vunpack.c.l.b16 %v880
  %v904 = vunpack.c.l.b16 %v881
  %v905 = vpack.c.b16 %v898, %v897
  %v906 = vpack.c.b16 %v900, %v899
  %v907 = vpack.c.b16 %v902, %v901
  %v908 = vpack.c.b16 %v904, %v903
  %vm913 = vcmask 523264
  %v914 = vsel %vm913, %v855, 0
  %v916 = vsel %vm913, %v858, 0
  %v918 = vsel %vm913, %v861, 0
  %v920 = vsel %vm913, %v864, 0
  %v922 = vsel %vm913, %v867, 0
  %v924 = vsel %vm913, %v870, 0
  %v926 = vsel %vm913, %v873, 0
  %928 = vmatprep.subr.bf16.mxu0 0
  %929 = vmatpush1.bf16.msra.mxu0 0
  %930 = vmatprep.subr.bf16.mxu0 0
  %931 = vmatpush1.bf16.msra.mxu0 0
  %932 = vmatprep.subr.bf16.mxu0 0
  %933 = vmatpush1.bf16.msra.mxu0 0
  %934 = vmatprep.subr.bf16.mxu0 0
  %935 = vmatpush1.bf16.msra.mxu0 0
  %936 = vmatprep.subr.bf16.mxu0 0
  %937 = vmatpush1.bf16.msra.mxu0 %v908
  %938 = vmatprep.subr.bf16.mxu0 0
  %939 = vmatpush1.bf16.msra.mxu0 %v907
  %940 = vmatprep.subr.bf16.mxu0 0
  %941 = vmatpush1.bf16.msra.mxu0 %v906
  %942 = vmatprep.subr.bf16.mxu0 0
  %943 = vmatpush1.bf16.msra.mxu0 %v905
  %944 = vmatprep.subr.bf16.mxu0 0
  %945 = vmatpush2.bf16.msra.mxu0 0
  %946 = vmatprep.subr.bf16.mxu0 0
  %947 = vmatpush2.bf16.msra.mxu0 0
  %948 = vmatprep.subr.bf16.mxu0 0
  %949 = vmatpush2.bf16.msra.mxu0 0
  %950 = vmatprep.subr.bf16.mxu0 0
  %951 = vmatpush2.bf16.msra.mxu0 0
  %952 = vmatprep.subr.bf16.mxu0 0
  %953 = vmatpush2.bf16.msra.mxu0 0
  %954 = vmatprep.subr.bf16.mxu0 0
  %955 = vmatpush2.bf16.msra.mxu0 0
  %956 = vmatprep.subr.bf16.mxu0 0
  %957 = vmatpush2.bf16.msra.mxu0 0
  %958 = vmatprep.subr.bf16.mxu0 0
  %959 = vmatpush2.bf16.msra.mxu0 0
  %960 = vmatprep.mubr.bf16.mxu0 0
  %961 = vmatmul.mubr.bf16.gmra.mxu0 %v914
  %v962 = vpop.f32.mrf.mxu0
  %v963 = vadd.f32 %v887, %v962
  %v964 = vpop.f32.mrf.mxu0
  %v965 = vpop.f32.mrf.mxu0
  %v966 = vadd.f32 %v887, %v965
  %v967 = vpop.f32.mrf.mxu0
  %968 = vmatprep.mubr.bf16.mxu0 0
  %969 = vmatmul.mubr.bf16.gmra.mxu0 %v916
  %v970 = vpop.f32.mrf.mxu0
  %v971 = vadd.f32 %v887, %v970
  %v972 = vpop.f32.mrf.mxu0
  %v973 = vpop.f32.mrf.mxu0
  %v974 = vadd.f32 %v887, %v973
  %v975 = vpop.f32.mrf.mxu0
  %976 = vmatprep.mubr.bf16.mxu0 0
  %977 = vmatmul.mubr.bf16.gmra.mxu0 %v918
  %v978 = vpop.f32.mrf.mxu0
  %v979 = vadd.f32 %v887, %v978
  %v980 = vpop.f32.mrf.mxu0
  %v981 = vpop.f32.mrf.mxu0
  %v982 = vadd.f32 %v887, %v981
  %v983 = vpop.f32.mrf.mxu0
  %984 = vmatprep.mubr.bf16.mxu0 0
  %985 = vmatmul.mubr.bf16.gmra.mxu0 %v920
  %v986 = vpop.f32.mrf.mxu0
  %v987 = vadd.f32 %v887, %v986
  %v988 = vpop.f32.mrf.mxu0
  %v989 = vpop.f32.mrf.mxu0
  %v990 = vadd.f32 %v887, %v989
  %v991 = vpop.f32.mrf.mxu0
  %992 = vmatprep.mubr.bf16.mxu0 0
  %993 = vmatmul.mubr.bf16.gmra.mxu0 %v922
  %v994 = vpop.f32.mrf.mxu0
  %v995 = vadd.f32 %v887, %v994
  %v996 = vpop.f32.mrf.mxu0
  %v997 = vpop.f32.mrf.mxu0
  %v998 = vadd.f32 %v887, %v997
  %v999 = vpop.f32.mrf.mxu0
  %1000 = vmatprep.mubr.bf16.mxu0 0
  %1001 = vmatmul.mubr.bf16.gmra.mxu0 %v924
  %v1002 = vpop.f32.mrf.mxu0
  %v1003 = vadd.f32 %v887, %v1002
  %v1004 = vpop.f32.mrf.mxu0
  %v1005 = vpop.f32.mrf.mxu0
  %v1006 = vadd.f32 %v887, %v1005
  %v1007 = vpop.f32.mrf.mxu0
  %1008 = vmatprep.mubr.bf16.mxu0 0
  %1009 = vmatmul.mubr.bf16.gmra.mxu0 %v926
  %v1010 = vpop.f32.mrf.mxu0
  %v1011 = vadd.f32 %v887, %v1010
  %v1012 = vpop.f32.mrf.mxu0
  %v1013 = vpop.f32.mrf.mxu0
  %v1014 = vadd.f32 %v887, %v1013
  %v1015 = vpop.f32.mrf.mxu0
  %1016 = vdwg.mxu0
  %v1017 = vmax.f32 %v963, 0.0
  %v1018 = vmax.f32 %v966, 0.0
  %v1019 = vmax.f32 %v971, 0.0
  %v1020 = vmax.f32 %v974, 0.0
  %v1021 = vmax.f32 %v979, 0.0
  %v1022 = vmax.f32 %v982, 0.0
  %v1023 = vmax.f32 %v987, 0.0
  %v1024 = vmax.f32 %v990, 0.0
  %v1025 = vmax.f32 %v995, 0.0
  %v1026 = vmax.f32 %v998, 0.0
  %v1027 = vmax.f32 %v1003, 0.0
  %v1028 = vmax.f32 %v1006, 0.0
  %v1029 = vmax.f32 %v1011, 0.0
  %v1030 = vmax.f32 %v1014, 0.0
  %v1031 = vld [vmem:[%s11] sm:$0xf]
  %v1032 = vld [vmem:[%s11 + $0x4] sm:$0xf]
  %v1033 = vld [vmem:[%s12] sm:$0x1]
  %v1035 = vlaneseq
  %v1036 = vshrl.u32 %v1035, 7
  %v1037 = vsub.s32 0, %v1036
  %v1038 = vrot.slane %v1033, %v1037
  %v1042 = vunpack.c.l.b16 %v1031
  %v1043 = vunpack.c.l.b16 %v1032
  %v1044 = vpack.c.b16 %v1043, %v1042
  %v1046 = vsel %vm323, %v638, 0
  %v1048 = vsel %vm323, %v639, 0
  %v1050 = vsel %vm323, %v640, 0
  %v1052 = vsel %vm323, %v641, 0
  %v1054 = vsel %vm323, %v642, 0
  %v1056 = vsel %vm323, %v643, 0
  %v1059 = vsel %vm323, %v644, 0
  %1061 = vmatprep.subr.bf16.mxu0 0
  %1062 = vmatpush1.bf16.msra.mxu0 0
  %1063 = vmatprep.subr.bf16.mxu0 0
  %1064 = vmatpush1.bf16.msra.mxu0 0
  %1065 = vmatprep.subr.bf16.mxu0 0
  %1066 = vmatpush1.bf16.msra.mxu0 0
  %1067 = vmatprep.subr.bf16.mxu0 0
  %1068 = vmatpush1.bf16.msra.mxu0 0
  %1069 = vmatprep.subr.bf16.mxu0 0
  %1070 = vmatpush1.bf16.msra.mxu0 0
  %1071 = vmatprep.subr.bf16.mxu0 0
  %1072 = vmatpush1.bf16.msra.mxu0 0
  %1073 = vmatprep.subr.bf16.mxu0 0
  %1074 = vmatpush1.bf16.msra.mxu0 0
  %1075 = vmatprep.subr.bf16.mxu0 0
  %1076 = vmatpush1.bf16.msra.mxu0 %v1044
  %1077 = vmatprep.subr.bf16.mxu0 0
  %1078 = vmatpush2.bf16.msra.mxu0 0
  %1079 = vmatprep.subr.bf16.mxu0 0
  %1080 = vmatpush2.bf16.msra.mxu0 0
  %1081 = vmatprep.subr.bf16.mxu0 0
  %1082 = vmatpush2.bf16.msra.mxu0 0
  %1083 = vmatprep.subr.bf16.mxu0 0
  %1084 = vmatpush2.bf16.msra.mxu0 0
  %1085 = vmatprep.subr.bf16.mxu0 0
  %1086 = vmatpush2.bf16.msra.mxu0 0
  %1087 = vmatprep.subr.bf16.mxu0 0
  %1088 = vmatpush2.bf16.msra.mxu0 0
  %1089 = vmatprep.subr.bf16.mxu0 0
  %1090 = vmatpush2.bf16.msra.mxu0 0
  %1091 = vmatprep.subr.bf16.mxu0 0
  %1092 = vmatpush2.bf16.msra.mxu0 0
  %1093 = vmatprep.mubr.bf16.mxu0 0
  %1094 = vmatmul.mubr.bf16.gmra.mxu0 %v1046
  %v1095 = vpop.f32.mrf.mxu0
  %v1096 = vadd.f32 %v1038, %v1095
  %v1097 = vpop.f32.mrf.mxu0
  %v1098 = vpop.f32.mrf.mxu0
  %v1099 = vadd.f32 %v1038, %v1098
  %v1100 = vpop.f32.mrf.mxu0
  %1101 = vmatprep.mubr.bf16.mxu0 0
  %1102 = vmatmul.mubr.bf16.gmra.mxu0 %v1048
  %v1103 = vpop.f32.mrf.mxu0
  %v1104 = vadd.f32 %v1038, %v1103
  %v1105 = vpop.f32.mrf.mxu0
  %v1106 = vpop.f32.mrf.mxu0
  %v1107 = vadd.f32 %v1038, %v1106
  %v1108 = vpop.f32.mrf.mxu0
  %1109 = vmatprep.mubr.bf16.mxu0 0
  %1110 = vmatmul.mubr.bf16.gmra.mxu0 %v1050
  %v1111 = vpop.f32.mrf.mxu0
  %v1112 = vadd.f32 %v1038, %v1111
  %v1113 = vpop.f32.mrf.mxu0
  %v1114 = vpop.f32.mrf.mxu0
  %v1115 = vadd.f32 %v1038, %v1114
  %v1116 = vpop.f32.mrf.mxu0
  %1117 = vmatprep.mubr.bf16.mxu0 0
  %1118 = vmatmul.mubr.bf16.gmra.mxu0 %v1052
  %v1119 = vpop.f32.mrf.mxu0
  %v1120 = vadd.f32 %v1038, %v1119
  %v1121 = vpop.f32.mrf.mxu0
  %v1122 = vpop.f32.mrf.mxu0
  %v1123 = vadd.f32 %v1038, %v1122
  %v1124 = vpop.f32.mrf.mxu0
  %1125 = vmatprep.mubr.bf16.mxu0 0
  %1126 = vmatmul.mubr.bf16.gmra.mxu0 %v1054
  %v1127 = vpop.f32.mrf.mxu0
  %v1128 = vadd.f32 %v1038, %v1127
  %v1129 = vpop.f32.mrf.mxu0
  %v1130 = vpop.f32.mrf.mxu0
  %v1131 = vadd.f32 %v1038, %v1130
  %v1132 = vpop.f32.mrf.mxu0
  %1133 = vmatprep.mubr.bf16.mxu0 0
  %1134 = vmatmul.mubr.bf16.gmra.mxu0 %v1056
  %v1135 = vpop.f32.mrf.mxu0
  %v1136 = vadd.f32 %v1038, %v1135
  %v1137 = vpop.f32.mrf.mxu0
  %v1138 = vpop.f32.mrf.mxu0
  %v1139 = vadd.f32 %v1038, %v1138
  %v1140 = vpop.f32.mrf.mxu0
  %1141 = vmatprep.mubr.bf16.mxu0 0
  %1142 = vmatmul.mubr.bf16.gmra.mxu0 %v1059
  %v1143 = vpop.f32.mrf.mxu0
  %v1144 = vadd.f32 %v1038, %v1143
  %v1145 = vpop.f32.mrf.mxu0
  %v1146 = vpop.f32.mrf.mxu0
  %v1147 = vadd.f32 %v1038, %v1146
  %v1148 = vpop.f32.mrf.mxu0
  %1149 = vdwg.mxu0
  %v1150 = vadd.f32 %v1017, %v1096
  %v1151 = vadd.f32 %v1018, %v1099
  %v1152 = vadd.f32 %v1019, %v1104
  %v1153 = vadd.f32 %v1020, %v1107
  %v1154 = vadd.f32 %v1021, %v1112
  %v1155 = vadd.f32 %v1022, %v1115
  %v1156 = vadd.f32 %v1023, %v1120
  %v1157 = vadd.f32 %v1024, %v1123
  %v1158 = vadd.f32 %v1025, %v1128
  %v1159 = vadd.f32 %v1026, %v1131
  %v1160 = vadd.f32 %v1027, %v1136
  %v1161 = vadd.f32 %v1028, %v1139
  %v1162 = vadd.f32 %v1029, %v1144
  %v1163 = vadd.f32 %v1030, %v1147
  %v1164 = vmax.f32 %v1150, 0.0
  %v1165 = vmax.f32 %v1151, 0.0
  %v1166 = vmax.f32 %v1152, 0.0
  %v1167 = vmax.f32 %v1153, 0.0
  %v1168 = vmax.f32 %v1154, 0.0
  %v1169 = vmax.f32 %v1155, 0.0
  %v1170 = vmax.f32 %v1156, 0.0
  %v1171 = vmax.f32 %v1157, 0.0
  %v1172 = vmax.f32 %v1158, 0.0
  %v1173 = vmax.f32 %v1159, 0.0
  %v1174 = vmax.f32 %v1160, 0.0
  %v1175 = vmax.f32 %v1161, 0.0
  %v1176 = vmax.f32 %v1162, 0.0
  %v1177 = vmax.f32 %v1163, 0.0
  %v1178 = vadd.f32 %v1164, %v1165
  %v1179 = vadd.f32 %v1166, %v1167
  %v1180 = vadd.f32 %v1168, %v1169
  %v1181 = vadd.f32 %v1170, %v1171
  %v1182 = vadd.f32 %v1172, %v1173
  %v1183 = vadd.f32 %v1174, %v1175
  %v1184 = vadd.f32 %v1176, %v1177
  %1186 = vrot.lane.b32.xlu0 %v1179, 32
  %v1187 = vpop.permute.xlu0 %1186
  %1190 = vrot.lane.b32.xlu0 %v1180, 64
  %v1191 = vpop.permute.xlu0 %1190
  %1194 = vrot.lane.b32.xlu0 %v1181, 96
  %v1195 = vpop.permute.xlu0 %1194
  %1198 = vrot.lane.b32.xlu0 %v1183, 32
  %v1199 = vpop.permute.xlu0 %1198
  %1202 = vrot.lane.b32.xlu0 %v1184, 64
  %v1203 = vpop.permute.xlu0 %1202
  %v1205 = vsel %vm367, %v1178, %v1187
  %v1206 = vsel %vm913, %v1205, %v1191
  %vm1207 = vcmask 785408
  %v1208 = vsel %vm1207, %v1206, %v1195
  %v1209 = vsel %vm367, %v1182, %v1199
  %v1210 = vsel %vm913, %v1209, %v1203
  %v1211 = vpack.c.bf16 %v1208, %v1208
  %v1212 = vpack.c.bf16 %v1210, %v1210
  %v1213 = vld [vmem:[%s13] sm:$0xf]
  %v1214 = vld [vmem:[%s13 + $0x4] sm:$0xf]
  %v1215 = vld [vmem:[%s13 + $0x8] sm:$0xf]
  %v1216 = vld [vmem:[%s13 + $0xc] sm:$0xf]
  %v1217 = vld [vmem:[%s13 + $0x10] sm:$0xf]
  %v1218 = vld [vmem:[%s13 + $0x14] sm:$0xf]
  %v1219 = vld [vmem:[%s13 + $0x18] sm:$0xf]
  %v1220 = vld [vmem:[%s13 + $0x1c] sm:$0xf]
  %v1221 = vld [vmem:[%s13 + $0x20] sm:$0xf]
  %v1222 = vld [vmem:[%s13 + $0x24] sm:$0xf]
  %v1223 = vld [vmem:[%s13 + $0x28] sm:$0xf]
  %v1224 = vld [vmem:[%s13 + $0x2c] sm:$0xf]
  %v1225 = vld [vmem:[%s13 + $0x30] sm:$0xf]
  %v1226 = vld [vmem:[%s13 + $0x34] sm:$0xf]
  %v1227 = vld [vmem:[%s13 + $0x38] sm:$0xf]
  %v1228 = vld [vmem:[%s13 + $0x3c] sm:$0xf]
  %v1229 = vld [vmem:[%s13 + $0x40] sm:$0xf]
  %v1230 = vld [vmem:[%s13 + $0x44] sm:$0xf]
  %v1231 = vld [vmem:[%s13 + $0x48] sm:$0xf]
  %v1232 = vld [vmem:[%s13 + $0x4c] sm:$0xf]
  %v1233 = vld [vmem:[%s13 + $0x50] sm:$0xf]
  %v1234 = vld [vmem:[%s13 + $0x54] sm:$0xf]
  %v1235 = vld [vmem:[%s13 + $0x58] sm:$0xf]
  %v1236 = vld [vmem:[%s13 + $0x5c] sm:$0xf]
  %v1237 = vld [vmem:[%s13 + $0x60] sm:$0xf]
  %v1238 = vld [vmem:[%s13 + $0x64] sm:$0xf]
  %v1239 = vld [vmem:[%s13 + $0x68] sm:$0xf]
  %v1240 = vld [vmem:[%s13 + $0x6c] sm:$0xf]
  %v1241 = vld [vmem:[%s14] sm:$0x1]
  %v1243 = vlaneseq
  %v1244 = vshrl.u32 %v1243, 7
  %v1245 = vsub.s32 0, %v1244
  %v1246 = vrot.slane %v1241, %v1245
  %v1276 = vunpack.c.l.b16 %v1213
  %v1277 = vunpack.c.l.b16 %v1214
  %v1278 = vunpack.c.l.b16 %v1215
  %v1279 = vunpack.c.l.b16 %v1216
  %v1280 = vunpack.c.l.b16 %v1217
  %v1281 = vunpack.c.l.b16 %v1218
  %v1282 = vunpack.c.l.b16 %v1219
  %v1283 = vunpack.c.l.b16 %v1220
  %v1284 = vunpack.c.l.b16 %v1221
  %v1285 = vunpack.c.l.b16 %v1222
  %v1286 = vunpack.c.l.b16 %v1223
  %v1287 = vunpack.c.l.b16 %v1224
  %v1288 = vunpack.c.l.b16 %v1225
  %v1289 = vunpack.c.l.b16 %v1226
  %v1290 = vunpack.c.l.b16 %v1227
  %v1291 = vunpack.c.l.b16 %v1228
  %v1292 = vunpack.c.l.b16 %v1229
  %v1293 = vunpack.c.l.b16 %v1230
  %v1294 = vunpack.c.l.b16 %v1231
  %v1295 = vunpack.c.l.b16 %v1232
  %v1296 = vunpack.c.l.b16 %v1233
  %v1297 = vunpack.c.l.b16 %v1234
  %v1298 = vunpack.c.l.b16 %v1235
  %v1299 = vunpack.c.l.b16 %v1236
  %v1300 = vunpack.c.l.b16 %v1237
  %v1301 = vunpack.c.l.b16 %v1238
  %v1302 = vunpack.c.l.b16 %v1239
  %v1303 = vunpack.c.l.b16 %v1240
  %v1304 = vpack.c.b16 %v1277, %v1276
  %v1305 = vpack.c.b16 %v1279, %v1278
  %v1306 = vpack.c.b16 %v1281, %v1280
  %v1307 = vpack.c.b16 %v1283, %v1282
  %v1308 = vpack.c.b16 %v1285, %v1284
  %v1309 = vpack.c.b16 %v1287, %v1286
  %v1310 = vpack.c.b16 %v1289, %v1288
  %v1311 = vpack.c.b16 %v1291, %v1290
  %v1312 = vpack.c.b16 %v1293, %v1292
  %v1313 = vpack.c.b16 %v1295, %v1294
  %v1314 = vpack.c.b16 %v1297, %v1296
  %v1315 = vpack.c.b16 %v1299, %v1298
  %v1316 = vpack.c.b16 %v1301, %v1300
  %v1317 = vpack.c.b16 %v1303, %v1302
  %v1333 = vsel %vm1207, %v1212, 0
  %1335 = vmatprep.subr.bf16.mxu0 0
  %1336 = vmatpush1.bf16.msra.mxu0 %v1311
  %1337 = vmatprep.subr.bf16.mxu0 0
  %1338 = vmatpush1.bf16.msra.mxu0 %v1310
  %1339 = vmatprep.subr.bf16.mxu0 0
  %1340 = vmatpush1.bf16.msra.mxu0 %v1309
  %1341 = vmatprep.subr.bf16.mxu0 0
  %1342 = vmatpush1.bf16.msra.mxu0 %v1308
  %1343 = vmatprep.subr.bf16.mxu0 0
  %1344 = vmatpush1.bf16.msra.mxu0 %v1307
  %1345 = vmatprep.subr.bf16.mxu0 0
  %1346 = vmatpush1.bf16.msra.mxu0 %v1306
  %1347 = vmatprep.subr.bf16.mxu0 0
  %1348 = vmatpush1.bf16.msra.mxu0 %v1305
  %1349 = vmatprep.subr.bf16.mxu0 0
  %1350 = vmatpush1.bf16.msra.mxu0 %v1304
  %1351 = vmatprep.subr.bf16.mxu0 0
  %1352 = vmatpush2.bf16.msra.mxu0 0
  %1353 = vmatprep.subr.bf16.mxu0 0
  %1354 = vmatpush2.bf16.msra.mxu0 0
  %1355 = vmatprep.subr.bf16.mxu0 0
  %1356 = vmatpush2.bf16.msra.mxu0 %v1317
  %1357 = vmatprep.subr.bf16.mxu0 0
  %1358 = vmatpush2.bf16.msra.mxu0 %v1316
  %1359 = vmatprep.subr.bf16.mxu0 0
  %1360 = vmatpush2.bf16.msra.mxu0 %v1315
  %1361 = vmatprep.subr.bf16.mxu0 0
  %1362 = vmatpush2.bf16.msra.mxu0 %v1314
  %1363 = vmatprep.subr.bf16.mxu0 0
  %1364 = vmatpush2.bf16.msra.mxu0 %v1313
  %1365 = vmatprep.subr.bf16.mxu0 0
  %1366 = vmatpush2.bf16.msra.mxu0 %v1312
  %1367 = vmatprep.mubr.bf16.mxu0 %v1333
  %1368 = vmatmul.mubr.bf16.gmra.mxu0 %v1211
  %v1369 = vpop.f32.mrf.mxu0
  %v1370 = vadd.f32 %v1246, %v1369
  %v1371 = vpop.f32.mrf.mxu0
  %v1372 = vpop.f32.mrf.mxu0
  %v1373 = vpop.f32.mrf.mxu0
  %1374 = vdwg.mxu0
  %v1375 = vmax.f32 %v1370, 0.0
  %v1376 = vpack.c.bf16 %v1375, %v1375
  %v1377 = vld [vmem:[%s15] sm:$0xf]
  %v1378 = vld [vmem:[%s15 + $0x4] sm:$0xf]
  %v1379 = vld [vmem:[%s15 + $0x8] sm:$0xf]
  %v1380 = vld [vmem:[%s15 + $0xc] sm:$0xf]
  %v1381 = vld [vmem:[%s15 + $0x10] sm:$0xf]
  %v1382 = vld [vmem:[%s15 + $0x14] sm:$0xf]
  %v1383 = vld [vmem:[%s15 + $0x18] sm:$0xf]
  %v1384 = vld [vmem:[%s15 + $0x1c] sm:$0xf]
  %v1385 = vld [vmem:[%s15 + $0x20] sm:$0xf]
  %v1386 = vld [vmem:[%s15 + $0x24] sm:$0xf]
  %v1387 = vld [vmem:[%s15 + $0x28] sm:$0xf]
  %v1388 = vld [vmem:[%s15 + $0x2c] sm:$0xf]
  %v1389 = vld [vmem:[%s15 + $0x30] sm:$0xf]
  %v1390 = vld [vmem:[%s15 + $0x34] sm:$0xf]
  %v1391 = vld [vmem:[%s15 + $0x38] sm:$0xf]
  %v1392 = vld [vmem:[%s15 + $0x3c] sm:$0xf]
  %v1393 = vld [vmem:[%s16] sm:$0x1]
  %v1395 = vlaneseq
  %v1396 = vshrl.u32 %v1395, 7
  %v1397 = vsub.s32 0, %v1396
  %v1398 = vrot.slane %v1393, %v1397
  %v1416 = vunpack.c.l.b16 %v1377
  %v1417 = vunpack.c.l.b16 %v1378
  %v1418 = vunpack.c.l.b16 %v1379
  %v1419 = vunpack.c.l.b16 %v1380
  %v1420 = vunpack.c.l.b16 %v1381
  %v1421 = vunpack.c.l.b16 %v1382
  %v1422 = vunpack.c.l.b16 %v1383
  %v1423 = vunpack.c.l.b16 %v1384
  %v1424 = vunpack.c.l.b16 %v1385
  %v1425 = vunpack.c.l.b16 %v1386
  %v1426 = vunpack.c.l.b16 %v1387
  %v1427 = vunpack.c.l.b16 %v1388
  %v1428 = vunpack.c.l.b16 %v1389
  %v1429 = vunpack.c.l.b16 %v1390
  %v1430 = vunpack.c.l.b16 %v1391
  %v1431 = vunpack.c.l.b16 %v1392
  %v1432 = vpack.c.b16 %v1417, %v1416
  %v1433 = vpack.c.b16 %v1419, %v1418
  %v1434 = vpack.c.b16 %v1421, %v1420
  %v1435 = vpack.c.b16 %v1423, %v1422
  %v1436 = vpack.c.b16 %v1425, %v1424
  %v1437 = vpack.c.b16 %v1427, %v1426
  %v1438 = vpack.c.b16 %v1429, %v1428
  %v1439 = vpack.c.b16 %v1431, %v1430
  %1448 = vmatprep.subr.bf16.mxu0 0
  %1449 = vmatpush1.bf16.msra.mxu0 %v1439
  %1450 = vmatprep.subr.bf16.mxu0 0
  %1451 = vmatpush1.bf16.msra.mxu0 %v1438
  %1452 = vmatprep.subr.bf16.mxu0 0
  %1453 = vmatpush1.bf16.msra.mxu0 %v1437
  %1454 = vmatprep.subr.bf16.mxu0 0
  %1455 = vmatpush1.bf16.msra.mxu0 %v1436
  %1456 = vmatprep.subr.bf16.mxu0 0
  %1457 = vmatpush1.bf16.msra.mxu0 %v1435
  %1458 = vmatprep.subr.bf16.mxu0 0
  %1459 = vmatpush1.bf16.msra.mxu0 %v1434
  %1460 = vmatprep.subr.bf16.mxu0 0
  %1461 = vmatpush1.bf16.msra.mxu0 %v1433
  %1462 = vmatprep.subr.bf16.mxu0 0
  %1463 = vmatpush1.bf16.msra.mxu0 %v1432
  %1464 = vmatprep.subr.bf16.mxu0 0
  %1465 = vmatpush2.bf16.msra.mxu0 0
  %1466 = vmatprep.subr.bf16.mxu0 0
  %1467 = vmatpush2.bf16.msra.mxu0 0
  %1468 = vmatprep.subr.bf16.mxu0 0
  %1469 = vmatpush2.bf16.msra.mxu0 0
  %1470 = vmatprep.subr.bf16.mxu0 0
  %1471 = vmatpush2.bf16.msra.mxu0 0
  %1472 = vmatprep.subr.bf16.mxu0 0
  %1473 = vmatpush2.bf16.msra.mxu0 0
  %1474 = vmatprep.subr.bf16.mxu0 0
  %1475 = vmatpush2.bf16.msra.mxu0 0
  %1476 = vmatprep.subr.bf16.mxu0 0
  %1477 = vmatpush2.bf16.msra.mxu0 0
  %1478 = vmatprep.subr.bf16.mxu0 0
  %1479 = vmatpush2.bf16.msra.mxu0 0
  %1480 = vmatprep.mubr.bf16.mxu0 0
  %1481 = vmatmul.mubr.bf16.gmra.mxu0 %v1376
  %v1482 = vpop.f32.mrf.mxu0
  %v1483 = vadd.f32 %v1398, %v1482
  %v1484 = vpop.f32.mrf.mxu0
  %v1485 = vpop.f32.mrf.mxu0
  %v1486 = vpop.f32.mrf.mxu0
  %1487 = vdwg.mxu0
  %v1488 = vmax.f32 %v1483, 0.0
  %v1489 = vpack.c.bf16 %v1488, %v1488
  %v1490 = vld [vmem:[%s17] sm:$0xf]
  %v1491 = vld [vmem:[%s17 + $0x4] sm:$0xf]
  %v1492 = vld [vmem:[%s17 + $0x8] sm:$0xf]
  %v1493 = vld [vmem:[%s17 + $0xc] sm:$0xf]
  %v1494 = vld [vmem:[%s17 + $0x10] sm:$0xf]
  %v1495 = vld [vmem:[%s17 + $0x14] sm:$0xf]
  %v1496 = vld [vmem:[%s17 + $0x18] sm:$0xf]
  %v1497 = vld [vmem:[%s17 + $0x1c] sm:$0xf]
  %v1498 = vld [vmem:[%s18] sm:$0x1]
  %v1500 = vlaneseq
  %v1501 = vshrl.u32 %v1500, 7
  %v1502 = vsub.s32 0, %v1501
  %v1503 = vrot.slane %v1498, %v1502
  %v1513 = vunpack.c.l.b16 %v1490
  %v1514 = vunpack.c.l.b16 %v1491
  %v1515 = vunpack.c.l.b16 %v1492
  %v1516 = vunpack.c.l.b16 %v1493
  %v1517 = vunpack.c.l.b16 %v1494
  %v1518 = vunpack.c.l.b16 %v1495
  %v1519 = vunpack.c.l.b16 %v1496
  %v1520 = vunpack.c.l.b16 %v1497
  %v1521 = vpack.c.b16 %v1514, %v1513
  %v1522 = vpack.c.b16 %v1516, %v1515
  %v1523 = vpack.c.b16 %v1518, %v1517
  %v1524 = vpack.c.b16 %v1520, %v1519
  %v1530 = vsel %vm913, %v1489, 0
  %1532 = vmatprep.subr.bf16.mxu0 0
  %1533 = vmatpush1.bf16.msra.mxu0 0
  %1534 = vmatprep.subr.bf16.mxu0 0
  %1535 = vmatpush1.bf16.msra.mxu0 0
  %1536 = vmatprep.subr.bf16.mxu0 0
  %1537 = vmatpush1.bf16.msra.mxu0 0
  %1538 = vmatprep.subr.bf16.mxu0 0
  %1539 = vmatpush1.bf16.msra.mxu0 0
  %1540 = vmatprep.subr.bf16.mxu0 0
  %1541 = vmatpush1.bf16.msra.mxu0 %v1524
  %1542 = vmatprep.subr.bf16.mxu0 0
  %1543 = vmatpush1.bf16.msra.mxu0 %v1523
  %1544 = vmatprep.subr.bf16.mxu0 0
  %1545 = vmatpush1.bf16.msra.mxu0 %v1522
  %1546 = vmatprep.subr.bf16.mxu0 0
  %1547 = vmatpush1.bf16.msra.mxu0 %v1521
  %1548 = vmatprep.subr.bf16.mxu0 0
  %1549 = vmatpush2.bf16.msra.mxu0 0
  %1550 = vmatprep.subr.bf16.mxu0 0
  %1551 = vmatpush2.bf16.msra.mxu0 0
  %1552 = vmatprep.subr.bf16.mxu0 0
  %1553 = vmatpush2.bf16.msra.mxu0 0
  %1554 = vmatprep.subr.bf16.mxu0 0
  %1555 = vmatpush2.bf16.msra.mxu0 0
  %1556 = vmatprep.subr.bf16.mxu0 0
  %1557 = vmatpush2.bf16.msra.mxu0 0
  %1558 = vmatprep.subr.bf16.mxu0 0
  %1559 = vmatpush2.bf16.msra.mxu0 0
  %1560 = vmatprep.subr.bf16.mxu0 0
  %1561 = vmatpush2.bf16.msra.mxu0 0
  %1562 = vmatprep.subr.bf16.mxu0 0
  %1563 = vmatpush2.bf16.msra.mxu0 0
  %1564 = vmatprep.mubr.bf16.mxu0 0
  %1565 = vmatmul.mubr.bf16.gmra.mxu0 %v1530
  %v1566 = vpop.f32.mrf.mxu0
  %v1567 = vadd.f32 %v1503, %v1566
  %v1568 = vpop.f32.mrf.mxu0
  %v1569 = vpop.f32.mrf.mxu0
  %v1570 = vpop.f32.mrf.mxu0
  %1571 = vdwg.mxu0
  %1572 = vst [vmem:[%s19] sm:$0xff] %v1567
  // Predicated region
  $region78: #{tcn_forward.1} parent=0 // pred_check
    _
  $region79: #{tcn_forward.1} parent=0 // pred_check_branch
    %1574 = sbr.rel (0) target = $region81
  $region80: #{tcn_forward.1} parent=0 // pred_region
    _
  $region81: #{tcn_forward.1} parent=0 // pred_fallthru
    _
  // Predicated region
  $region82: #{tcn_forward.1} parent=0 // pred_check
    _
  $region83: #{tcn_forward.1} parent=0 // pred_check_branch
    %1576 = sbr.rel (0) target = $region85
  $region84: #{tcn_forward.1} parent=0 // pred_region
    _
  $region85: #{tcn_forward.1} parent=0 // pred_fallthru
    _

</llo_original>
